<compile_context>
chip_gen: v7x
topology: tpu7x:2x2x1
jax: 0.10.0
libtpu: 0.0.40
codegen_flags: <defaults>
</compile_context>

<pallas_src>
import functools

import jax
import jax.numpy as jnp
import numpy as np
from jax.experimental import pallas as pl
from jax.experimental.pallas import tpu as pltpu


def _bottleneck_kernel(x_ref, wxr_ref, wxz_ref, wxn_ref, wh_ref,
                       br_ref, bz_ref, bin_ref, bhn_ref,
                       wfc_ref, bfc_ref,
                       y_ref,
                       h_carry, gir_s, giz_s, gin_s, h_all_s,
                       *, Tc, B, H):
    """One T-chunk of the GRU + FC.

    x_ref   : (Tc*B, D_in)  bf16  time-major chunk (row = t*B + b)
    wx*_ref : (D_in, H)     bf16  per-gate input weights (r, z, n)
    wh_ref  : (H, 3H)       bf16  fused recurrent weights (cols r | z | n)
    br_ref  : (1, H)        f32   b_ih_r + b_hh_r (folded)
    bz_ref  : (1, H)        f32   b_ih_z + b_hh_z (folded)
    bin_ref : (1, H)        f32   b_ih_n
    bhn_ref : (1, H)        f32   b_hh_n (must stay inside r*(...) per GRU)
    wfc_ref : (H, D_pad)    bf16  fc.weight.T, zero-padded lane-dense
    bfc_ref : (1, D_pad)    f32
    y_ref   : (Tc*B, D_pad) f32   output chunk
    h_carry : (B, H)        f32   persistent hidden state across chunks
    gi*_s   : (Tc*B, H)     f32   per-gate input pre-activations
    h_all_s : (Tc*B, H)     f32   hidden states of this chunk
    """
    @pl.when(pl.program_id(0) == 0)
    def _init():
        h_carry[...] = jnp.zeros_like(h_carry)

    # ---- Batched input projection for the whole chunk (3 bf16 GEMMs),
    # ---- streamed straight into the flat staging slabs. ----
    x = x_ref[...]
    gir_s[...] = (jnp.dot(x, wxr_ref[...], preferred_element_type=jnp.float32)
                  + br_ref[...])
    giz_s[...] = (jnp.dot(x, wxz_ref[...], preferred_element_type=jnp.float32)
                  + bz_ref[...])
    gin_s[...] = (jnp.dot(x, wxn_ref[...], preferred_element_type=jnp.float32)
                  + bin_ref[...])

    bhn = bhn_ref[...]
    wh = wh_ref[...]

    # ---- Serial recurrence: ONE fused (B,H)@(H,3H) MXU push per step. ----
    # Tc is small here -> fully static unroll with static row slices.
    # For realistic T, use lax.fori_loop(..., unroll=4 or 8) instead.
    h = h_carry[...]                                   # f32 carry
    for t in range(Tc):
        row = t * B
        gh = jnp.dot(h.astype(jnp.bfloat16), wh,
                     preferred_element_type=jnp.float32)           # (B, 3H)
        gh_r = gh[:, 0:H]
        gh_z = gh[:, H:2 * H]
        gh_n = gh[:, 2 * H:3 * H] + bhn
        r = jax.nn.sigmoid(gir_s[pl.ds(row, B), :] + gh_r)
        z = jax.nn.sigmoid(giz_s[pl.ds(row, B), :] + gh_z)
        n = jnp.tanh(gin_s[pl.ds(row, B), :] + r * gh_n)
        h = (1.0 - z) * n + z * h
        h_all_s[pl.ds(row, B), :] = h
    h_carry[...] = h

    # ---- Per-chunk FC projection + lane-dense output store (overlaps with
    # ---- the next chunk's input DMA via BlockSpec pipelining). ----
    y = (jnp.dot(h_all_s[...].astype(jnp.bfloat16), wfc_ref[...],
                 preferred_element_type=jnp.float32) + bfc_ref[...])
    y_ref[...] = y.astype(y_ref.dtype)


def bottleneck_pallas(x, params, *, chunk_t=8):
    """x : (B, C, T, F) float32 -> (B, C, T, F) float32."""
    B, C, T, F = x.shape
    D_in = C * F
    H = params["weight_hh"].shape[1]
    D_out = params["fc_w"].shape[0]
    assert D_out == D_in

    # Chunk length along T: divides T and keeps the chunk row count 8-aligned.
    Tc = None
    for cand in range(min(chunk_t, T), 0, -1):
        if T % cand == 0 and (cand * B) % 8 == 0:
            Tc = cand
            break
    if Tc is None:
        Tc = T  # single chunk: blocks equal full array dims
    num_chunks = T // Tc
    rows = Tc * B

    # b c t f -> (t b) (c f): time-major flat slab, bf16 matmul operand.
    x_seq = (jnp.transpose(x, (2, 0, 1, 3))
             .reshape(T * B, D_in)
             .astype(jnp.bfloat16))

    wih = params["weight_ih"].astype(jnp.float32)   # (3H, D_in), rows r|z|n
    whh = params["weight_hh"].astype(jnp.float32)   # (3H, H)
    bih = params["bias_ih"].astype(jnp.float32)
    bhh = params["bias_hh"].astype(jnp.float32)

    # Per-gate input weights (transposed), bf16 for the MXU.
    wx_r = jnp.transpose(wih[0:H]).astype(jnp.bfloat16)           # (D_in, H)
    wx_z = jnp.transpose(wih[H:2 * H]).astype(jnp.bfloat16)
    wx_n = jnp.transpose(wih[2 * H:3 * H]).astype(jnp.bfloat16)
    # Fused recurrent weights: one (H, 3H) operand -> one MXU push per step.
    wh = jnp.transpose(whh).astype(jnp.bfloat16)                  # (H, 3H)

    # Fold b_hh_r / b_hh_z into the input-projection biases (f32).
    b_r = (bih[0:H] + bhh[0:H]).reshape(1, H)
    b_z = (bih[H:2 * H] + bhh[H:2 * H]).reshape(1, H)
    b_in = bih[2 * H:3 * H].reshape(1, H)
    b_hn = bhh[2 * H:3 * H].reshape(1, H)

    # Lane-dense FC output: pad the output dim up to a multiple of 128.
    D_pad = ((D_out + 127) // 128) * 128
    wfc = jnp.transpose(params["fc_w"]).astype(jnp.float32)       # (H, D_out)
    bfc = params["fc_b"].reshape(1, D_out).astype(jnp.float32)
    if D_pad != D_out:
        wfc = jnp.pad(wfc, ((0, 0), (0, D_pad - D_out)))
        bfc = jnp.pad(bfc, ((0, 0), (0, D_pad - D_out)))
    wfc = wfc.astype(jnp.bfloat16)

    kernel = functools.partial(_bottleneck_kernel, Tc=Tc, B=B, H=H)

    y_seq = pl.pallas_call(
        kernel,
        out_shape=jax.ShapeDtypeStruct((T * B, D_pad), jnp.float32),
        grid=(num_chunks,),
        in_specs=[
            pl.BlockSpec((rows, D_in), lambda c: (c, 0)),     # x chunk
            pl.BlockSpec((D_in, H), lambda c: (0, 0)),        # wx_r
            pl.BlockSpec((D_in, H), lambda c: (0, 0)),        # wx_z
            pl.BlockSpec((D_in, H), lambda c: (0, 0)),        # wx_n
            pl.BlockSpec((H, 3 * H), lambda c: (0, 0)),       # wh fused
            pl.BlockSpec((1, H), lambda c: (0, 0)),           # b_r
            pl.BlockSpec((1, H), lambda c: (0, 0)),           # b_z
            pl.BlockSpec((1, H), lambda c: (0, 0)),           # b_in
            pl.BlockSpec((1, H), lambda c: (0, 0)),           # b_hn
            pl.BlockSpec((H, D_pad), lambda c: (0, 0)),       # wfc (padded)
            pl.BlockSpec((1, D_pad), lambda c: (0, 0)),       # bfc (padded)
        ],
        out_specs=pl.BlockSpec((rows, D_pad), lambda c: (c, 0)),
        scratch_shapes=[
            pltpu.VMEM((B, H), jnp.float32),       # h_carry (persists)
            pltpu.VMEM((rows, H), jnp.float32),    # gi_r
            pltpu.VMEM((rows, H), jnp.float32),    # gi_z
            pltpu.VMEM((rows, H), jnp.float32),    # gi_n
            pltpu.VMEM((rows, H), jnp.float32),    # h_all
        ],
        compiler_params=pltpu.CompilerParams(
            # Must be "arbitrary": the hidden state is carried across chunks.
            dimension_semantics=("arbitrary",),
            # At realistic DeepVQE sizes set vmem_limit_bytes against v7x's
            # 64 MiB physical VMEM (double-buffered x/y chunks + slabs).
        ),
    )(x_seq, wx_r, wx_z, wx_n, wh, b_r, b_z, b_in, b_hn, wfc, bfc)

    # (t b) d_pad -> b c t f : slice lane padding, one transpose back.
    y = y_seq[:, :D_out].reshape(T, B, C, F).transpose(1, 2, 0, 3)
    return y


def bottleneck_ref(x, params):
    """Pure-JAX f32 reference matching torch.nn.GRU(batch_first=True) + Linear."""
    B, C, T, F = x.shape
    D_in = C * F
    H = params["weight_hh"].shape[1]

    x_btd = jnp.transpose(x, (0, 2, 1, 3)).reshape(B, T, D_in).astype(jnp.float32)
    wih, whh = params["weight_ih"], params["weight_hh"]
    bih, bhh = params["bias_ih"], params["bias_hh"]

    def step(h, xt):
        gi = xt @ wih.T + bih
        gh = h @ whh.T + bhh
        r = jax.nn.sigmoid(gi[:, :H] + gh[:, :H])
        z = jax.nn.sigmoid(gi[:, H:2 * H] + gh[:, H:2 * H])
        n = jnp.tanh(gi[:, 2 * H:] + r * gh[:, 2 * H:])
        h_new = (1.0 - z) * n + z * h
        return h_new, h_new

    h0 = jnp.zeros((B, H), jnp.float32)
    _, hs = jax.lax.scan(step, h0, jnp.transpose(x_btd, (1, 0, 2)))  # (T, B, H)
    y_seq = hs @ params["fc_w"].T + params["fc_b"]                   # (T, B, D_in)
    y = jnp.transpose(y_seq, (1, 0, 2)).reshape(B, T, C, F).transpose(0, 2, 1, 3)
    return y


def make_params(key, input_size, hidden_size):
    """Deterministic synthetic parameters with PyTorch GRU/Linear shapes."""
    ks = jax.random.split(key, 6)
    s = 1.0 / np.sqrt(hidden_size)
    return {
        "weight_ih": jax.random.uniform(ks[0], (3 * hidden_size, input_size),
                                        jnp.float32, -s, s),
        "weight_hh": jax.random.uniform(ks[1], (3 * hidden_size, hidden_size),
                                        jnp.float32, -s, s),
        "bias_ih": jax.random.uniform(ks[2], (3 * hidden_size,), jnp.float32, -s, s),
        "bias_hh": jax.random.uniform(ks[3], (3 * hidden_size,), jnp.float32, -s, s),
        "fc_w": jax.random.uniform(ks[4], (input_size, hidden_size),
                                   jnp.float32, -s, s),
        "fc_b": jax.random.uniform(ks[5], (input_size,), jnp.float32, -s, s),
    }


if __name__ == "__main__":
    B, C, T, F = 2, 4, 16, 16          # input_size = C*F = 64
    hidden_size = 32

    key = jax.random.PRNGKey(0)
    kx, kp = jax.random.split(key)
    x = jax.random.normal(kx, (B, C, T, F), jnp.float32)
    params = make_params(kp, C * F, hidden_size)

    y = jax.block_until_ready(bottleneck_pallas(x, params))
    y_ref = jax.block_until_ready(bottleneck_ref(x, params))

    # Matmul operands are bf16 in the kernel (f32 accumulation + f32 gate
    # math), so compare against the f32 reference at bf16-level tolerance.
    np.testing.assert_allclose(np.asarray(y), np.asarray(y_ref),
                               rtol=5e-2, atol=5e-2)
    assert y.shape == x.shape and y.dtype == jnp.float32
    print("KERNEL_OK")
</pallas_src>

<mosaic_0001>
module attributes {stable_mosaic.version = 11 : i64} {
  func.func @_bottleneck_kernel(%arg0: i32, %arg1: memref<16x64xbf16, #tpu.memory_space<vmem>>, %arg2: memref<64x32xbf16, #tpu.memory_space<vmem>>, %arg3: memref<64x32xbf16, #tpu.memory_space<vmem>>, %arg4: memref<64x32xbf16, #tpu.memory_space<vmem>>, %arg5: memref<32x96xbf16, #tpu.memory_space<vmem>>, %arg6: memref<1x32xf32, #tpu.memory_space<vmem>>, %arg7: memref<1x32xf32, #tpu.memory_space<vmem>>, %arg8: memref<1x32xf32, #tpu.memory_space<vmem>>, %arg9: memref<1x32xf32, #tpu.memory_space<vmem>>, %arg10: memref<32x128xbf16, #tpu.memory_space<vmem>>, %arg11: memref<1x128xf32, #tpu.memory_space<vmem>>, %arg12: memref<16x128xf32, #tpu.memory_space<vmem>>, %arg13: memref<2x32xf32, #tpu.memory_space<vmem>>, %arg14: memref<16x32xf32, #tpu.memory_space<vmem>>, %arg15: memref<16x32xf32, #tpu.memory_space<vmem>>, %arg16: memref<16x32xf32, #tpu.memory_space<vmem>>, %arg17: memref<16x32xf32, #tpu.memory_space<vmem>>) attributes {dimension_semantics = [#tpu.dimension_semantics<arbitrary>], iteration_bounds = array<i64: 2>, scalar_prefetch = 0 : i64, scratch_operands = 5 : i64, tpu.core_type = #tpu.core_type<tc>, window_params = [{transform_indices = @transform_0, window_bounds = array<i64: 16, 64>}, {pipeline_mode = #tpu.pipeline_mode<synchronous>, transform_indices = @transform_1, window_bounds = array<i64: 64, 32>}, {pipeline_mode = #tpu.pipeline_mode<synchronous>, transform_indices = @transform_2, window_bounds = array<i64: 64, 32>}, {pipeline_mode = #tpu.pipeline_mode<synchronous>, transform_indices = @transform_3, window_bounds = array<i64: 64, 32>}, {pipeline_mode = #tpu.pipeline_mode<synchronous>, transform_indices = @transform_4, window_bounds = array<i64: 32, 96>}, {pipeline_mode = #tpu.pipeline_mode<synchronous>, transform_indices = @transform_5, window_bounds = array<i64: 1, 32>}, {pipeline_mode = #tpu.pipeline_mode<synchronous>, transform_indices = @transform_6, window_bounds = array<i64: 1, 32>}, {pipeline_mode = #tpu.pipeline_mode<synchronous>, transform_indices = @transform_7, window_bounds = array<i64: 1, 32>}, {pipeline_mode = #tpu.pipeline_mode<synchronous>, transform_indices = @transform_8, window_bounds = array<i64: 1, 32>}, {pipeline_mode = #tpu.pipeline_mode<synchronous>, transform_indices = @transform_9, window_bounds = array<i64: 32, 128>}, {pipeline_mode = #tpu.pipeline_mode<synchronous>, transform_indices = @transform_10, window_bounds = array<i64: 1, 128>}, {transform_indices = @transform_11, window_bounds = array<i64: 16, 128>}]} {
    %c0_i32 = arith.constant 0 : i32
    %0 = arith.cmpi eq, %arg0, %c0_i32 : i32
    %1 = arith.extui %0 : i1 to i32
    %c0_i32_0 = arith.constant 0 : i32
    %2 = arith.cmpi ne, %1, %c0_i32_0 : i32
    scf.if %2 {
      %cst_128 = arith.constant 0.000000e+00 : f32
      %282 = vector.broadcast %cst_128 : f32 to vector<2x32xf32>
      %c0_129 = arith.constant 0 : index
      %c0_130 = arith.constant 0 : index
      %283 = vector.load %arg13[%c0_129, %c0_130] : memref<2x32xf32, #tpu.memory_space<vmem>>, vector<2x32xf32>
      tpu.vector_store %arg13[%c0_129, %c0_130], %282 {strides = array<i32>} : memref<2x32xf32, #tpu.memory_space<vmem>>, vector<2x32xf32>,
    } else {
    }
    %c0 = arith.constant 0 : index
    %c0_1 = arith.constant 0 : index
    %3 = vector.load %arg1[%c0, %c0_1] : memref<16x64xbf16, #tpu.memory_space<vmem>>, vector<16x64xbf16>
    %c0_2 = arith.constant 0 : index
    %c0_3 = arith.constant 0 : index
    %4 = vector.load %arg2[%c0_2, %c0_3] : memref<64x32xbf16, #tpu.memory_space<vmem>>, vector<64x32xbf16>
    %cst = arith.constant dense<0.000000e+00> : vector<16x32xf32>
    %5 = tpu.matmul %3, %4, %cst {dimension_numbers = #tpu.dot_dimension_numbers<[1], [0], [0], [1], [0, 0, 1, 1], [], []>} : vector<16x64xbf16>, vector<64x32xbf16>, vector<16x32xf32> -> vector<16x32xf32>
    %c0_4 = arith.constant 0 : index
    %c0_5 = arith.constant 0 : index
    %6 = vector.load %arg6[%c0_4, %c0_5] : memref<1x32xf32, #tpu.memory_space<vmem>>, vector<1x32xf32>
    %7 = vector.broadcast %6 : vector<1x32xf32> to vector<16x32xf32>
    %8 = arith.addf %5, %7 : vector<16x32xf32>
    %c0_6 = arith.constant 0 : index
    %c0_7 = arith.constant 0 : index
    %9 = vector.load %arg14[%c0_6, %c0_7] : memref<16x32xf32, #tpu.memory_space<vmem>>, vector<16x32xf32>
    tpu.vector_store %arg14[%c0_6, %c0_7], %8 {strides = array<i32>} : memref<16x32xf32, #tpu.memory_space<vmem>>, vector<16x32xf32>,
    %c0_8 = arith.constant 0 : index
    %c0_9 = arith.constant 0 : index
    %10 = vector.load %arg3[%c0_8, %c0_9] : memref<64x32xbf16, #tpu.memory_space<vmem>>, vector<64x32xbf16>
    %cst_10 = arith.constant dense<0.000000e+00> : vector<16x32xf32>
    %11 = tpu.matmul %3, %10, %cst_10 {dimension_numbers = #tpu.dot_dimension_numbers<[1], [0], [0], [1], [0, 0, 1, 1], [], []>} : vector<16x64xbf16>, vector<64x32xbf16>, vector<16x32xf32> -> vector<16x32xf32>
    %c0_11 = arith.constant 0 : index
    %c0_12 = arith.constant 0 : index
    %12 = vector.load %arg7[%c0_11, %c0_12] : memref<1x32xf32, #tpu.memory_space<vmem>>, vector<1x32xf32>
    %13 = vector.broadcast %12 : vector<1x32xf32> to vector<16x32xf32>
    %14 = arith.addf %11, %13 : vector<16x32xf32>
    %c0_13 = arith.constant 0 : index
    %c0_14 = arith.constant 0 : index
    %15 = vector.load %arg15[%c0_13, %c0_14] : memref<16x32xf32, #tpu.memory_space<vmem>>, vector<16x32xf32>
    tpu.vector_store %arg15[%c0_13, %c0_14], %14 {strides = array<i32>} : memref<16x32xf32, #tpu.memory_space<vmem>>, vector<16x32xf32>,
    %c0_15 = arith.constant 0 : index
    %c0_16 = arith.constant 0 : index
    %16 = vector.load %arg4[%c0_15, %c0_16] : memref<64x32xbf16, #tpu.memory_space<vmem>>, vector<64x32xbf16>
    %cst_17 = arith.constant dense<0.000000e+00> : vector<16x32xf32>
    %17 = tpu.matmul %3, %16, %cst_17 {dimension_numbers = #tpu.dot_dimension_numbers<[1], [0], [0], [1], [0, 0, 1, 1], [], []>} : vector<16x64xbf16>, vector<64x32xbf16>, vector<16x32xf32> -> vector<16x32xf32>
    %c0_18 = arith.constant 0 : index
    %c0_19 = arith.constant 0 : index
    %18 = vector.load %arg8[%c0_18, %c0_19] : memref<1x32xf32, #tpu.memory_space<vmem>>, vector<1x32xf32>
    %19 = vector.broadcast %18 : vector<1x32xf32> to vector<16x32xf32>
    %20 = arith.addf %17, %19 : vector<16x32xf32>
    %c0_20 = arith.constant 0 : index
    %c0_21 = arith.constant 0 : index
    %21 = vector.load %arg16[%c0_20, %c0_21] : memref<16x32xf32, #tpu.memory_space<vmem>>, vector<16x32xf32>
    tpu.vector_store %arg16[%c0_20, %c0_21], %20 {strides = array<i32>} : memref<16x32xf32, #tpu.memory_space<vmem>>, vector<16x32xf32>,
    %c0_22 = arith.constant 0 : index
    %c0_23 = arith.constant 0 : index
    %22 = vector.load %arg9[%c0_22, %c0_23] : memref<1x32xf32, #tpu.memory_space<vmem>>, vector<1x32xf32>
    %c0_24 = arith.constant 0 : index
    %c0_25 = arith.constant 0 : index
    %23 = vector.load %arg5[%c0_24, %c0_25] : memref<32x96xbf16, #tpu.memory_space<vmem>>, vector<32x96xbf16>
    %c0_26 = arith.constant 0 : index
    %c0_27 = arith.constant 0 : index
    %24 = vector.load %arg13[%c0_26, %c0_27] : memref<2x32xf32, #tpu.memory_space<vmem>>, vector<2x32xf32>
    %25 = arith.truncf %24 : vector<2x32xf32> to vector<2x32xbf16>
    %cst_28 = arith.constant dense<0.000000e+00> : vector<2x96xf32>
    %26 = tpu.matmul %25, %23, %cst_28 {dimension_numbers = #tpu.dot_dimension_numbers<[1], [0], [0], [1], [0, 0, 1, 1], [], []>} : vector<2x32xbf16>, vector<32x96xbf16>, vector<2x96xf32> -> vector<2x96xf32>
    %27 = vector.extract_strided_slice %26 {offsets = [0, 0], sizes = [2, 32], strides = [1, 1]} : vector<2x96xf32> to vector<2x32xf32>
    %28 = vector.extract_strided_slice %26 {offsets = [0, 32], sizes = [2, 32], strides = [1, 1]} : vector<2x96xf32> to vector<2x32xf32>
    %29 = vector.extract_strided_slice %26 {offsets = [0, 64], sizes = [2, 32], strides = [1, 1]} : vector<2x96xf32> to vector<2x32xf32>
    %30 = vector.broadcast %22 : vector<1x32xf32> to vector<2x32xf32>
    %31 = arith.addf %29, %30 : vector<2x32xf32>
    %c0_29 = arith.constant 0 : index
    %c0_30 = arith.constant 0 : index
    %32 = vector.load %arg14[%c0_29, %c0_30] : memref<16x32xf32, #tpu.memory_space<vmem>>, vector<2x32xf32>
    %33 = arith.addf %32, %27 : vector<2x32xf32>
    %34 = arith.negf %33 : vector<2x32xf32>
    %35 = math.exp %34 : vector<2x32xf32>
    %cst_31 = arith.constant 1.000000e+00 : f32
    %36 = vector.broadcast %cst_31 : f32 to vector<2x32xf32>
    %37 = arith.addf %36, %35 : vector<2x32xf32>
    %38 = arith.divf %36, %37 : vector<2x32xf32>
    %c0_32 = arith.constant 0 : index
    %c0_33 = arith.constant 0 : index
    %39 = vector.load %arg15[%c0_32, %c0_33] : memref<16x32xf32, #tpu.memory_space<vmem>>, vector<2x32xf32>
    %40 = arith.addf %39, %28 : vector<2x32xf32>
    %41 = arith.negf %40 : vector<2x32xf32>
    %42 = math.exp %41 : vector<2x32xf32>
    %cst_34 = arith.constant 1.000000e+00 : f32
    %43 = vector.broadcast %cst_34 : f32 to vector<2x32xf32>
    %44 = arith.addf %43, %42 : vector<2x32xf32>
    %45 = arith.divf %43, %44 : vector<2x32xf32>
    %c0_35 = arith.constant 0 : index
    %c0_36 = arith.constant 0 : index
    %46 = vector.load %arg16[%c0_35, %c0_36] : memref<16x32xf32, #tpu.memory_space<vmem>>, vector<2x32xf32>
    %47 = arith.mulf %38, %31 : vector<2x32xf32>
    %48 = arith.addf %46, %47 : vector<2x32xf32>
    %49 = math.tanh %48 : vector<2x32xf32>
    %cst_37 = arith.constant 1.000000e+00 : f32
    %50 = vector.broadcast %cst_37 : f32 to vector<2x32xf32>
    %51 = arith.subf %50, %45 : vector<2x32xf32>
    %52 = arith.mulf %51, %49 : vector<2x32xf32>
    %53 = arith.mulf %45, %24 : vector<2x32xf32>
    %54 = arith.addf %52, %53 : vector<2x32xf32>
    %c0_38 = arith.constant 0 : index
    %c0_39 = arith.constant 0 : index
    %55 = vector.load %arg17[%c0_38, %c0_39] : memref<16x32xf32, #tpu.memory_space<vmem>>, vector<2x32xf32>
    tpu.vector_store %arg17[%c0_38, %c0_39], %54 {strides = array<i32>} : memref<16x32xf32, #tpu.memory_space<vmem>>, vector<2x32xf32>,
    %56 = arith.truncf %54 : vector<2x32xf32> to vector<2x32xbf16>
    %cst_40 = arith.constant dense<0.000000e+00> : vector<2x96xf32>
    %57 = tpu.matmul %56, %23, %cst_40 {dimension_numbers = #tpu.dot_dimension_numbers<[1], [0], [0], [1], [0, 0, 1, 1], [], []>} : vector<2x32xbf16>, vector<32x96xbf16>, vector<2x96xf32> -> vector<2x96xf32>
    %58 = vector.extract_strided_slice %57 {offsets = [0, 0], sizes = [2, 32], strides = [1, 1]} : vector<2x96xf32> to vector<2x32xf32>
    %59 = vector.extract_strided_slice %57 {offsets = [0, 32], sizes = [2, 32], strides = [1, 1]} : vector<2x96xf32> to vector<2x32xf32>
    %60 = vector.extract_strided_slice %57 {offsets = [0, 64], sizes = [2, 32], strides = [1, 1]} : vector<2x96xf32> to vector<2x32xf32>
    %61 = vector.broadcast %22 : vector<1x32xf32> to vector<2x32xf32>
    %62 = arith.addf %60, %61 : vector<2x32xf32>
    %c2 = arith.constant 2 : index
    %c0_41 = arith.constant 0 : index
    %63 = vector.load %arg14[%c2, %c0_41] : memref<16x32xf32, #tpu.memory_space<vmem>>, vector<2x32xf32>
    %64 = arith.addf %63, %58 : vector<2x32xf32>
    %65 = arith.negf %64 : vector<2x32xf32>
    %66 = math.exp %65 : vector<2x32xf32>
    %cst_42 = arith.constant 1.000000e+00 : f32
    %67 = vector.broadcast %cst_42 : f32 to vector<2x32xf32>
    %68 = arith.addf %67, %66 : vector<2x32xf32>
    %69 = arith.divf %67, %68 : vector<2x32xf32>
    %c2_43 = arith.constant 2 : index
    %c0_44 = arith.constant 0 : index
    %70 = vector.load %arg15[%c2_43, %c0_44] : memref<16x32xf32, #tpu.memory_space<vmem>>, vector<2x32xf32>
    %71 = arith.addf %70, %59 : vector<2x32xf32>
    %72 = arith.negf %71 : vector<2x32xf32>
    %73 = math.exp %72 : vector<2x32xf32>
    %cst_45 = arith.constant 1.000000e+00 : f32
    %74 = vector.broadcast %cst_45 : f32 to vector<2x32xf32>
    %75 = arith.addf %74, %73 : vector<2x32xf32>
    %76 = arith.divf %74, %75 : vector<2x32xf32>
    %c2_46 = arith.constant 2 : index
    %c0_47 = arith.constant 0 : index
    %77 = vector.load %arg16[%c2_46, %c0_47] : memref<16x32xf32, #tpu.memory_space<vmem>>, vector<2x32xf32>
    %78 = arith.mulf %69, %62 : vector<2x32xf32>
    %79 = arith.addf %77, %78 : vector<2x32xf32>
    %80 = math.tanh %79 : vector<2x32xf32>
    %cst_48 = arith.constant 1.000000e+00 : f32
    %81 = vector.broadcast %cst_48 : f32 to vector<2x32xf32>
    %82 = arith.subf %81, %76 : vector<2x32xf32>
    %83 = arith.mulf %82, %80 : vector<2x32xf32>
    %84 = arith.mulf %76, %54 : vector<2x32xf32>
    %85 = arith.addf %83, %84 : vector<2x32xf32>
    %c2_49 = arith.constant 2 : index
    %c0_50 = arith.constant 0 : index
    %86 = vector.load %arg17[%c2_49, %c0_50] : memref<16x32xf32, #tpu.memory_space<vmem>>, vector<2x32xf32>
    tpu.vector_store %arg17[%c2_49, %c0_50], %85 {strides = array<i32>} : memref<16x32xf32, #tpu.memory_space<vmem>>, vector<2x32xf32>,
    %87 = arith.truncf %85 : vector<2x32xf32> to vector<2x32xbf16>
    %cst_51 = arith.constant dense<0.000000e+00> : vector<2x96xf32>
    %88 = tpu.matmul %87, %23, %cst_51 {dimension_numbers = #tpu.dot_dimension_numbers<[1], [0], [0], [1], [0, 0, 1, 1], [], []>} : vector<2x32xbf16>, vector<32x96xbf16>, vector<2x96xf32> -> vector<2x96xf32>
    %89 = vector.extract_strided_slice %88 {offsets = [0, 0], sizes = [2, 32], strides = [1, 1]} : vector<2x96xf32> to vector<2x32xf32>
    %90 = vector.extract_strided_slice %88 {offsets = [0, 32], sizes = [2, 32], strides = [1, 1]} : vector<2x96xf32> to vector<2x32xf32>
    %91 = vector.extract_strided_slice %88 {offsets = [0, 64], sizes = [2, 32], strides = [1, 1]} : vector<2x96xf32> to vector<2x32xf32>
    %92 = vector.broadcast %22 : vector<1x32xf32> to vector<2x32xf32>
    %93 = arith.addf %91, %92 : vector<2x32xf32>
    %c4 = arith.constant 4 : index
    %c0_52 = arith.constant 0 : index
    %94 = vector.load %arg14[%c4, %c0_52] : memref<16x32xf32, #tpu.memory_space<vmem>>, vector<2x32xf32>
    %95 = arith.addf %94, %89 : vector<2x32xf32>
    %96 = arith.negf %95 : vector<2x32xf32>
    %97 = math.exp %96 : vector<2x32xf32>
    %cst_53 = arith.constant 1.000000e+00 : f32
    %98 = vector.broadcast %cst_53 : f32 to vector<2x32xf32>
    %99 = arith.addf %98, %97 : vector<2x32xf32>
    %100 = arith.divf %98, %99 : vector<2x32xf32>
    %c4_54 = arith.constant 4 : index
    %c0_55 = arith.constant 0 : index
    %101 = vector.load %arg15[%c4_54, %c0_55] : memref<16x32xf32, #tpu.memory_space<vmem>>, vector<2x32xf32>
    %102 = arith.addf %101, %90 : vector<2x32xf32>
    %103 = arith.negf %102 : vector<2x32xf32>
    %104 = math.exp %103 : vector<2x32xf32>
    %cst_56 = arith.constant 1.000000e+00 : f32
    %105 = vector.broadcast %cst_56 : f32 to vector<2x32xf32>
    %106 = arith.addf %105, %104 : vector<2x32xf32>
    %107 = arith.divf %105, %106 : vector<2x32xf32>
    %c4_57 = arith.constant 4 : index
    %c0_58 = arith.constant 0 : index
    %108 = vector.load %arg16[%c4_57, %c0_58] : memref<16x32xf32, #tpu.memory_space<vmem>>, vector<2x32xf32>
    %109 = arith.mulf %100, %93 : vector<2x32xf32>
    %110 = arith.addf %108, %109 : vector<2x32xf32>
    %111 = math.tanh %110 : vector<2x32xf32>
    %cst_59 = arith.constant 1.000000e+00 : f32
    %112 = vector.broadcast %cst_59 : f32 to vector<2x32xf32>
    %113 = arith.subf %112, %107 : vector<2x32xf32>
    %114 = arith.mulf %113, %111 : vector<2x32xf32>
    %115 = arith.mulf %107, %85 : vector<2x32xf32>
    %116 = arith.addf %114, %115 : vector<2x32xf32>
    %c4_60 = arith.constant 4 : index
    %c0_61 = arith.constant 0 : index
    %117 = vector.load %arg17[%c4_60, %c0_61] : memref<16x32xf32, #tpu.memory_space<vmem>>, vector<2x32xf32>
    tpu.vector_store %arg17[%c4_60, %c0_61], %116 {strides = array<i32>} : memref<16x32xf32, #tpu.memory_space<vmem>>, vector<2x32xf32>,
    %118 = arith.truncf %116 : vector<2x32xf32> to vector<2x32xbf16>
    %cst_62 = arith.constant dense<0.000000e+00> : vector<2x96xf32>
    %119 = tpu.matmul %118, %23, %cst_62 {dimension_numbers = #tpu.dot_dimension_numbers<[1], [0], [0], [1], [0, 0, 1, 1], [], []>} : vector<2x32xbf16>, vector<32x96xbf16>, vector<2x96xf32> -> vector<2x96xf32>
    %120 = vector.extract_strided_slice %119 {offsets = [0, 0], sizes = [2, 32], strides = [1, 1]} : vector<2x96xf32> to vector<2x32xf32>
    %121 = vector.extract_strided_slice %119 {offsets = [0, 32], sizes = [2, 32], strides = [1, 1]} : vector<2x96xf32> to vector<2x32xf32>
    %122 = vector.extract_strided_slice %119 {offsets = [0, 64], sizes = [2, 32], strides = [1, 1]} : vector<2x96xf32> to vector<2x32xf32>
    %123 = vector.broadcast %22 : vector<1x32xf32> to vector<2x32xf32>
    %124 = arith.addf %122, %123 : vector<2x32xf32>
    %c6 = arith.constant 6 : index
    %c0_63 = arith.constant 0 : index
    %125 = vector.load %arg14[%c6, %c0_63] : memref<16x32xf32, #tpu.memory_space<vmem>>, vector<2x32xf32>
    %126 = arith.addf %125, %120 : vector<2x32xf32>
    %127 = arith.negf %126 : vector<2x32xf32>
    %128 = math.exp %127 : vector<2x32xf32>
    %cst_64 = arith.constant 1.000000e+00 : f32
    %129 = vector.broadcast %cst_64 : f32 to vector<2x32xf32>
    %130 = arith.addf %129, %128 : vector<2x32xf32>
    %131 = arith.divf %129, %130 : vector<2x32xf32>
    %c6_65 = arith.constant 6 : index
    %c0_66 = arith.constant 0 : index
    %132 = vector.load %arg15[%c6_65, %c0_66] : memref<16x32xf32, #tpu.memory_space<vmem>>, vector<2x32xf32>
    %133 = arith.addf %132, %121 : vector<2x32xf32>
    %134 = arith.negf %133 : vector<2x32xf32>
    %135 = math.exp %134 : vector<2x32xf32>
    %cst_67 = arith.constant 1.000000e+00 : f32
    %136 = vector.broadcast %cst_67 : f32 to vector<2x32xf32>
    %137 = arith.addf %136, %135 : vector<2x32xf32>
    %138 = arith.divf %136, %137 : vector<2x32xf32>
    %c6_68 = arith.constant 6 : index
    %c0_69 = arith.constant 0 : index
    %139 = vector.load %arg16[%c6_68, %c0_69] : memref<16x32xf32, #tpu.memory_space<vmem>>, vector<2x32xf32>
    %140 = arith.mulf %131, %124 : vector<2x32xf32>
    %141 = arith.addf %139, %140 : vector<2x32xf32>
    %142 = math.tanh %141 : vector<2x32xf32>
    %cst_70 = arith.constant 1.000000e+00 : f32
    %143 = vector.broadcast %cst_70 : f32 to vector<2x32xf32>
    %144 = arith.subf %143, %138 : vector<2x32xf32>
    %145 = arith.mulf %144, %142 : vector<2x32xf32>
    %146 = arith.mulf %138, %116 : vector<2x32xf32>
    %147 = arith.addf %145, %146 : vector<2x32xf32>
    %c6_71 = arith.constant 6 : index
    %c0_72 = arith.constant 0 : index
    %148 = vector.load %arg17[%c6_71, %c0_72] : memref<16x32xf32, #tpu.memory_space<vmem>>, vector<2x32xf32>
    tpu.vector_store %arg17[%c6_71, %c0_72], %147 {strides = array<i32>} : memref<16x32xf32, #tpu.memory_space<vmem>>, vector<2x32xf32>,
    %149 = arith.truncf %147 : vector<2x32xf32> to vector<2x32xbf16>
    %cst_73 = arith.constant dense<0.000000e+00> : vector<2x96xf32>
    %150 = tpu.matmul %149, %23, %cst_73 {dimension_numbers = #tpu.dot_dimension_numbers<[1], [0], [0], [1], [0, 0, 1, 1], [], []>} : vector<2x32xbf16>, vector<32x96xbf16>, vector<2x96xf32> -> vector<2x96xf32>
    %151 = vector.extract_strided_slice %150 {offsets = [0, 0], sizes = [2, 32], strides = [1, 1]} : vector<2x96xf32> to vector<2x32xf32>
    %152 = vector.extract_strided_slice %150 {offsets = [0, 32], sizes = [2, 32], strides = [1, 1]} : vector<2x96xf32> to vector<2x32xf32>
    %153 = vector.extract_strided_slice %150 {offsets = [0, 64], sizes = [2, 32], strides = [1, 1]} : vector<2x96xf32> to vector<2x32xf32>
    %154 = vector.broadcast %22 : vector<1x32xf32> to vector<2x32xf32>
    %155 = arith.addf %153, %154 : vector<2x32xf32>
    %c8 = arith.constant 8 : index
    %c0_74 = arith.constant 0 : index
    %156 = vector.load %arg14[%c8, %c0_74] : memref<16x32xf32, #tpu.memory_space<vmem>>, vector<2x32xf32>
    %157 = arith.addf %156, %151 : vector<2x32xf32>
    %158 = arith.negf %157 : vector<2x32xf32>
    %159 = math.exp %158 : vector<2x32xf32>
    %cst_75 = arith.constant 1.000000e+00 : f32
    %160 = vector.broadcast %cst_75 : f32 to vector<2x32xf32>
    %161 = arith.addf %160, %159 : vector<2x32xf32>
    %162 = arith.divf %160, %161 : vector<2x32xf32>
    %c8_76 = arith.constant 8 : index
    %c0_77 = arith.constant 0 : index
    %163 = vector.load %arg15[%c8_76, %c0_77] : memref<16x32xf32, #tpu.memory_space<vmem>>, vector<2x32xf32>
    %164 = arith.addf %163, %152 : vector<2x32xf32>
    %165 = arith.negf %164 : vector<2x32xf32>
    %166 = math.exp %165 : vector<2x32xf32>
    %cst_78 = arith.constant 1.000000e+00 : f32
    %167 = vector.broadcast %cst_78 : f32 to vector<2x32xf32>
    %168 = arith.addf %167, %166 : vector<2x32xf32>
    %169 = arith.divf %167, %168 : vector<2x32xf32>
    %c8_79 = arith.constant 8 : index
    %c0_80 = arith.constant 0 : index
    %170 = vector.load %arg16[%c8_79, %c0_80] : memref<16x32xf32, #tpu.memory_space<vmem>>, vector<2x32xf32>
    %171 = arith.mulf %162, %155 : vector<2x32xf32>
    %172 = arith.addf %170, %171 : vector<2x32xf32>
    %173 = math.tanh %172 : vector<2x32xf32>
    %cst_81 = arith.constant 1.000000e+00 : f32
    %174 = vector.broadcast %cst_81 : f32 to vector<2x32xf32>
    %175 = arith.subf %174, %169 : vector<2x32xf32>
    %176 = arith.mulf %175, %173 : vector<2x32xf32>
    %177 = arith.mulf %169, %147 : vector<2x32xf32>
    %178 = arith.addf %176, %177 : vector<2x32xf32>
    %c8_82 = arith.constant 8 : index
    %c0_83 = arith.constant 0 : index
    %179 = vector.load %arg17[%c8_82, %c0_83] : memref<16x32xf32, #tpu.memory_space<vmem>>, vector<2x32xf32>
    tpu.vector_store %arg17[%c8_82, %c0_83], %178 {strides = array<i32>} : memref<16x32xf32, #tpu.memory_space<vmem>>, vector<2x32xf32>,
    %180 = arith.truncf %178 : vector<2x32xf32> to vector<2x32xbf16>
    %cst_84 = arith.constant dense<0.000000e+00> : vector<2x96xf32>
    %181 = tpu.matmul %180, %23, %cst_84 {dimension_numbers = #tpu.dot_dimension_numbers<[1], [0], [0], [1], [0, 0, 1, 1], [], []>} : vector<2x32xbf16>, vector<32x96xbf16>, vector<2x96xf32> -> vector<2x96xf32>
    %182 = vector.extract_strided_slice %181 {offsets = [0, 0], sizes = [2, 32], strides = [1, 1]} : vector<2x96xf32> to vector<2x32xf32>
    %183 = vector.extract_strided_slice %181 {offsets = [0, 32], sizes = [2, 32], strides = [1, 1]} : vector<2x96xf32> to vector<2x32xf32>
    %184 = vector.extract_strided_slice %181 {offsets = [0, 64], sizes = [2, 32], strides = [1, 1]} : vector<2x96xf32> to vector<2x32xf32>
    %185 = vector.broadcast %22 : vector<1x32xf32> to vector<2x32xf32>
    %186 = arith.addf %184, %185 : vector<2x32xf32>
    %c10 = arith.constant 10 : index
    %c0_85 = arith.constant 0 : index
    %187 = vector.load %arg14[%c10, %c0_85] : memref<16x32xf32, #tpu.memory_space<vmem>>, vector<2x32xf32>
    %188 = arith.addf %187, %182 : vector<2x32xf32>
    %189 = arith.negf %188 : vector<2x32xf32>
    %190 = math.exp %189 : vector<2x32xf32>
    %cst_86 = arith.constant 1.000000e+00 : f32
    %191 = vector.broadcast %cst_86 : f32 to vector<2x32xf32>
    %192 = arith.addf %191, %190 : vector<2x32xf32>
    %193 = arith.divf %191, %192 : vector<2x32xf32>
    %c10_87 = arith.constant 10 : index
    %c0_88 = arith.constant 0 : index
    %194 = vector.load %arg15[%c10_87, %c0_88] : memref<16x32xf32, #tpu.memory_space<vmem>>, vector<2x32xf32>
    %195 = arith.addf %194, %183 : vector<2x32xf32>
    %196 = arith.negf %195 : vector<2x32xf32>
    %197 = math.exp %196 : vector<2x32xf32>
    %cst_89 = arith.constant 1.000000e+00 : f32
    %198 = vector.broadcast %cst_89 : f32 to vector<2x32xf32>
    %199 = arith.addf %198, %197 : vector<2x32xf32>
    %200 = arith.divf %198, %199 : vector<2x32xf32>
    %c10_90 = arith.constant 10 : index
    %c0_91 = arith.constant 0 : index
    %201 = vector.load %arg16[%c10_90, %c0_91] : memref<16x32xf32, #tpu.memory_space<vmem>>, vector<2x32xf32>
    %202 = arith.mulf %193, %186 : vector<2x32xf32>
    %203 = arith.addf %201, %202 : vector<2x32xf32>
    %204 = math.tanh %203 : vector<2x32xf32>
    %cst_92 = arith.constant 1.000000e+00 : f32
    %205 = vector.broadcast %cst_92 : f32 to vector<2x32xf32>
    %206 = arith.subf %205, %200 : vector<2x32xf32>
    %207 = arith.mulf %206, %204 : vector<2x32xf32>
    %208 = arith.mulf %200, %178 : vector<2x32xf32>
    %209 = arith.addf %207, %208 : vector<2x32xf32>
    %c10_93 = arith.constant 10 : index
    %c0_94 = arith.constant 0 : index
    %210 = vector.load %arg17[%c10_93, %c0_94] : memref<16x32xf32, #tpu.memory_space<vmem>>, vector<2x32xf32>
    tpu.vector_store %arg17[%c10_93, %c0_94], %209 {strides = array<i32>} : memref<16x32xf32, #tpu.memory_space<vmem>>, vector<2x32xf32>,
    %211 = arith.truncf %209 : vector<2x32xf32> to vector<2x32xbf16>
    %cst_95 = arith.constant dense<0.000000e+00> : vector<2x96xf32>
    %212 = tpu.matmul %211, %23, %cst_95 {dimension_numbers = #tpu.dot_dimension_numbers<[1], [0], [0], [1], [0, 0, 1, 1], [], []>} : vector<2x32xbf16>, vector<32x96xbf16>, vector<2x96xf32> -> vector<2x96xf32>
    %213 = vector.extract_strided_slice %212 {offsets = [0, 0], sizes = [2, 32], strides = [1, 1]} : vector<2x96xf32> to vector<2x32xf32>
    %214 = vector.extract_strided_slice %212 {offsets = [0, 32], sizes = [2, 32], strides = [1, 1]} : vector<2x96xf32> to vector<2x32xf32>
    %215 = vector.extract_strided_slice %212 {offsets = [0, 64], sizes = [2, 32], strides = [1, 1]} : vector<2x96xf32> to vector<2x32xf32>
    %216 = vector.broadcast %22 : vector<1x32xf32> to vector<2x32xf32>
    %217 = arith.addf %215, %216 : vector<2x32xf32>
    %c12 = arith.constant 12 : index
    %c0_96 = arith.constant 0 : index
    %218 = vector.load %arg14[%c12, %c0_96] : memref<16x32xf32, #tpu.memory_space<vmem>>, vector<2x32xf32>
    %219 = arith.addf %218, %213 : vector<2x32xf32>
    %220 = arith.negf %219 : vector<2x32xf32>
    %221 = math.exp %220 : vector<2x32xf32>
    %cst_97 = arith.constant 1.000000e+00 : f32
    %222 = vector.broadcast %cst_97 : f32 to vector<2x32xf32>
    %223 = arith.addf %222, %221 : vector<2x32xf32>
    %224 = arith.divf %222, %223 : vector<2x32xf32>
    %c12_98 = arith.constant 12 : index
    %c0_99 = arith.constant 0 : index
    %225 = vector.load %arg15[%c12_98, %c0_99] : memref<16x32xf32, #tpu.memory_space<vmem>>, vector<2x32xf32>
    %226 = arith.addf %225, %214 : vector<2x32xf32>
    %227 = arith.negf %226 : vector<2x32xf32>
    %228 = math.exp %227 : vector<2x32xf32>
    %cst_100 = arith.constant 1.000000e+00 : f32
    %229 = vector.broadcast %cst_100 : f32 to vector<2x32xf32>
    %230 = arith.addf %229, %228 : vector<2x32xf32>
    %231 = arith.divf %229, %230 : vector<2x32xf32>
    %c12_101 = arith.constant 12 : index
    %c0_102 = arith.constant 0 : index
    %232 = vector.load %arg16[%c12_101, %c0_102] : memref<16x32xf32, #tpu.memory_space<vmem>>, vector<2x32xf32>
    %233 = arith.mulf %224, %217 : vector<2x32xf32>
    %234 = arith.addf %232, %233 : vector<2x32xf32>
    %235 = math.tanh %234 : vector<2x32xf32>
    %cst_103 = arith.constant 1.000000e+00 : f32
    %236 = vector.broadcast %cst_103 : f32 to vector<2x32xf32>
    %237 = arith.subf %236, %231 : vector<2x32xf32>
    %238 = arith.mulf %237, %235 : vector<2x32xf32>
    %239 = arith.mulf %231, %209 : vector<2x32xf32>
    %240 = arith.addf %238, %239 : vector<2x32xf32>
    %c12_104 = arith.constant 12 : index
    %c0_105 = arith.constant 0 : index
    %241 = vector.load %arg17[%c12_104, %c0_105] : memref<16x32xf32, #tpu.memory_space<vmem>>, vector<2x32xf32>
    tpu.vector_store %arg17[%c12_104, %c0_105], %240 {strides = array<i32>} : memref<16x32xf32, #tpu.memory_space<vmem>>, vector<2x32xf32>,
    %242 = arith.truncf %240 : vector<2x32xf32> to vector<2x32xbf16>
    %cst_106 = arith.constant dense<0.000000e+00> : vector<2x96xf32>
    %243 = tpu.matmul %242, %23, %cst_106 {dimension_numbers = #tpu.dot_dimension_numbers<[1], [0], [0], [1], [0, 0, 1, 1], [], []>} : vector<2x32xbf16>, vector<32x96xbf16>, vector<2x96xf32> -> vector<2x96xf32>
    %244 = vector.extract_strided_slice %243 {offsets = [0, 0], sizes = [2, 32], strides = [1, 1]} : vector<2x96xf32> to vector<2x32xf32>
    %245 = vector.extract_strided_slice %243 {offsets = [0, 32], sizes = [2, 32], strides = [1, 1]} : vector<2x96xf32> to vector<2x32xf32>
    %246 = vector.extract_strided_slice %243 {offsets = [0, 64], sizes = [2, 32], strides = [1, 1]} : vector<2x96xf32> to vector<2x32xf32>
    %247 = vector.broadcast %22 : vector<1x32xf32> to vector<2x32xf32>
    %248 = arith.addf %246, %247 : vector<2x32xf32>
    %c14 = arith.constant 14 : index
    %c0_107 = arith.constant 0 : index
    %249 = vector.load %arg14[%c14, %c0_107] : memref<16x32xf32, #tpu.memory_space<vmem>>, vector<2x32xf32>
    %250 = arith.addf %249, %244 : vector<2x32xf32>
    %251 = arith.negf %250 : vector<2x32xf32>
    %252 = math.exp %251 : vector<2x32xf32>
    %cst_108 = arith.constant 1.000000e+00 : f32
    %253 = vector.broadcast %cst_108 : f32 to vector<2x32xf32>
    %254 = arith.addf %253, %252 : vector<2x32xf32>
    %255 = arith.divf %253, %254 : vector<2x32xf32>
    %c14_109 = arith.constant 14 : index
    %c0_110 = arith.constant 0 : index
    %256 = vector.load %arg15[%c14_109, %c0_110] : memref<16x32xf32, #tpu.memory_space<vmem>>, vector<2x32xf32>
    %257 = arith.addf %256, %245 : vector<2x32xf32>
    %258 = arith.negf %257 : vector<2x32xf32>
    %259 = math.exp %258 : vector<2x32xf32>
    %cst_111 = arith.constant 1.000000e+00 : f32
    %260 = vector.broadcast %cst_111 : f32 to vector<2x32xf32>
    %261 = arith.addf %260, %259 : vector<2x32xf32>
    %262 = arith.divf %260, %261 : vector<2x32xf32>
    %c14_112 = arith.constant 14 : index
    %c0_113 = arith.constant 0 : index
    %263 = vector.load %arg16[%c14_112, %c0_113] : memref<16x32xf32, #tpu.memory_space<vmem>>, vector<2x32xf32>
    %264 = arith.mulf %255, %248 : vector<2x32xf32>
    %265 = arith.addf %263, %264 : vector<2x32xf32>
    %266 = math.tanh %265 : vector<2x32xf32>
    %cst_114 = arith.constant 1.000000e+00 : f32
    %267 = vector.broadcast %cst_114 : f32 to vector<2x32xf32>
    %268 = arith.subf %267, %262 : vector<2x32xf32>
    %269 = arith.mulf %268, %266 : vector<2x32xf32>
    %270 = arith.mulf %262, %240 : vector<2x32xf32>
    %271 = arith.addf %269, %270 : vector<2x32xf32>
    %c14_115 = arith.constant 14 : index
    %c0_116 = arith.constant 0 : index
    %272 = vector.load %arg17[%c14_115, %c0_116] : memref<16x32xf32, #tpu.memory_space<vmem>>, vector<2x32xf32>
    tpu.vector_store %arg17[%c14_115, %c0_116], %271 {strides = array<i32>} : memref<16x32xf32, #tpu.memory_space<vmem>>, vector<2x32xf32>,
    %c0_117 = arith.constant 0 : index
    %c0_118 = arith.constant 0 : index
    %273 = vector.load %arg13[%c0_117, %c0_118] : memref<2x32xf32, #tpu.memory_space<vmem>>, vector<2x32xf32>
    tpu.vector_store %arg13[%c0_117, %c0_118], %271 {strides = array<i32>} : memref<2x32xf32, #tpu.memory_space<vmem>>, vector<2x32xf32>,
    %c0_119 = arith.constant 0 : index
    %c0_120 = arith.constant 0 : index
    %274 = vector.load %arg17[%c0_119, %c0_120] : memref<16x32xf32, #tpu.memory_space<vmem>>, vector<16x32xf32>
    %275 = arith.truncf %274 : vector<16x32xf32> to vector<16x32xbf16>
    %c0_121 = arith.constant 0 : index
    %c0_122 = arith.constant 0 : index
    %276 = vector.load %arg10[%c0_121, %c0_122] : memref<32x128xbf16, #tpu.memory_space<vmem>>, vector<32x128xbf16>
    %cst_123 = arith.constant dense<0.000000e+00> : vector<16x128xf32>
    %277 = tpu.matmul %275, %276, %cst_123 {dimension_numbers = #tpu.dot_dimension_numbers<[1], [0], [0], [1], [0, 0, 1, 1], [], []>} : vector<16x32xbf16>, vector<32x128xbf16>, vector<16x128xf32> -> vector<16x128xf32>
    %c0_124 = arith.constant 0 : index
    %c0_125 = arith.constant 0 : index
    %278 = vector.load %arg11[%c0_124, %c0_125] : memref<1x128xf32, #tpu.memory_space<vmem>>, vector<1x128xf32>
    %279 = vector.broadcast %278 : vector<1x128xf32> to vector<16x128xf32>
    %280 = arith.addf %277, %279 : vector<16x128xf32>
    %c0_126 = arith.constant 0 : index
    %c0_127 = arith.constant 0 : index
    %281 = vector.load %arg12[%c0_126, %c0_127] : memref<16x128xf32, #tpu.memory_space<vmem>>, vector<16x128xf32>
    tpu.vector_store %arg12[%c0_126, %c0_127], %280 {strides = array<i32>} : memref<16x128xf32, #tpu.memory_space<vmem>>, vector<16x128xf32>,
    return
  }
  func.func @transform_0(%arg0: i32) -> (i32, i32) {
    %c0_i32 = arith.constant 0 : i32
    %c0_i32_0 = arith.constant 0 : i32
    return %arg0, %c0_i32 : i32, i32
  }
  func.func @transform_1(%arg0: i32) -> (i32, i32) {
    %c0_i32 = arith.constant 0 : i32
    %c0_i32_0 = arith.constant 0 : i32
    %c0_i32_1 = arith.constant 0 : i32
    return %c0_i32, %c0_i32_0 : i32, i32
  }
  func.func @transform_2(%arg0: i32) -> (i32, i32) {
    %c0_i32 = arith.constant 0 : i32
    %c0_i32_0 = arith.constant 0 : i32
    %c0_i32_1 = arith.constant 0 : i32
    return %c0_i32, %c0_i32_0 : i32, i32
  }
  func.func @transform_3(%arg0: i32) -> (i32, i32) {
    %c0_i32 = arith.constant 0 : i32
    %c0_i32_0 = arith.constant 0 : i32
    %c0_i32_1 = arith.constant 0 : i32
    return %c0_i32, %c0_i32_0 : i32, i32
  }
  func.func @transform_4(%arg0: i32) -> (i32, i32) {
    %c0_i32 = arith.constant 0 : i32
    %c0_i32_0 = arith.constant 0 : i32
    %c0_i32_1 = arith.constant 0 : i32
    return %c0_i32, %c0_i32_0 : i32, i32
  }
  func.func @transform_5(%arg0: i32) -> (i32, i32) {
    %c0_i32 = arith.constant 0 : i32
    %c0_i32_0 = arith.constant 0 : i32
    %c0_i32_1 = arith.constant 0 : i32
    return %c0_i32, %c0_i32_0 : i32, i32
  }
  func.func @transform_6(%arg0: i32) -> (i32, i32) {
    %c0_i32 = arith.constant 0 : i32
    %c0_i32_0 = arith.constant 0 : i32
    %c0_i32_1 = arith.constant 0 : i32
    return %c0_i32, %c0_i32_0 : i32, i32
  }
  func.func @transform_7(%arg0: i32) -> (i32, i32) {
    %c0_i32 = arith.constant 0 : i32
    %c0_i32_0 = arith.constant 0 : i32
    %c0_i32_1 = arith.constant 0 : i32
    return %c0_i32, %c0_i32_0 : i32, i32
  }
  func.func @transform_8(%arg0: i32) -> (i32, i32) {
    %c0_i32 = arith.constant 0 : i32
    %c0_i32_0 = arith.constant 0 : i32
    %c0_i32_1 = arith.constant 0 : i32
    return %c0_i32, %c0_i32_0 : i32, i32
  }
  func.func @transform_9(%arg0: i32) -> (i32, i32) {
    %c0_i32 = arith.constant 0 : i32
    %c0_i32_0 = arith.constant 0 : i32
    %c0_i32_1 = arith.constant 0 : i32
    return %c0_i32, %c0_i32_0 : i32, i32
  }
  func.func @transform_10(%arg0: i32) -> (i32, i32) {
    %c0_i32 = arith.constant 0 : i32
    %c0_i32_0 = arith.constant 0 : i32
    %c0_i32_1 = arith.constant 0 : i32
    return %c0_i32, %c0_i32_0 : i32, i32
  }
  func.func @transform_11(%arg0: i32) -> (i32, i32) {
    %c0_i32 = arith.constant 0 : i32
    %c0_i32_0 = arith.constant 0 : i32
    return %arg0, %c0_i32 : i32, i32
  }
}

</mosaic_0001>

<llo_original>
// kernel: tpu_custom_call.1
$region0: #{tpu_custom_call.1}
  #allocation0 [shape = 'u32[]', space=smem, size = 0x4, offset = 0x4, fixed_abs, tag = 'smem constant byte address 0x4 - core index']
  #allocation1 [shape = 'u32[144,128]{1,0:T(1,128)}', space=vmem, size = 0x12000, scoped, tag = 'internal scratch']
  #allocation2 [shape = 'f32[2,32]{1,0:T(2,128)}', space=vmem, size = 0x400, scoped, tag = 'scratch operand']
  #allocation3 [shape = 'f32[16,32]{1,0:T(8,128)}', space=vmem, size = 0x2000, scoped, tag = 'scratch operand']
  #allocation4 [shape = 'f32[16,32]{1,0:T(8,128)}', space=vmem, size = 0x2000, scoped, tag = 'scratch operand']
  #allocation5 [shape = 'f32[16,32]{1,0:T(8,128)}', space=vmem, size = 0x2000, scoped, tag = 'scratch operand']
  #allocation6 [shape = 'f32[16,32]{1,0:T(8,128)}', space=vmem, size = 0x2000, scoped, tag = 'scratch operand']
  %s0 = inlined_call_operand.vmem [shape: bf16[32,64], index: 0, kind: input, shape index: {}]
  %s1 = inlined_call_operand.vmem [shape: bf16[64,32], index: 1, kind: input, shape index: {}]
  %s2 = inlined_call_operand.vmem [shape: bf16[64,32], index: 2, kind: input, shape index: {}]
  %s3 = inlined_call_operand.vmem [shape: bf16[64,32], index: 3, kind: input, shape index: {}]
  %s4 = inlined_call_operand.vmem [shape: bf16[32,96], index: 4, kind: input, shape index: {}]
  %s5 = inlined_call_operand.vmem [shape: f32[1,32], index: 5, kind: input, shape index: {}]
  %s6 = inlined_call_operand.vmem [shape: f32[1,32], index: 6, kind: input, shape index: {}]
  %s7 = inlined_call_operand.vmem [shape: f32[1,32], index: 7, kind: input, shape index: {}]
  %s8 = inlined_call_operand.vmem [shape: f32[1,32], index: 8, kind: input, shape index: {}]
  %s9 = inlined_call_operand.vmem [shape: bf16[32,128], index: 9, kind: input, shape index: {}]
  %s10 = inlined_call_operand.vmem [shape: f32[1,128], index: 10, kind: input, shape index: {}]
  %s11 = inlined_call_operand.hbm [shape: f32[32,128], index: 11, kind: output, shape index: {}]
  %s12 = sld [smem:[#allocation0]]
  $region81: #{tpu_custom_call.1} parent=0
    _
  %s14 = ssub.s32 1, %s12
  %s15 = scalar_select 0, %s14, %s12
  $region1: #{tpu_custom_call.1} parent=0
    #allocation7 [shape = 'u8[16384]{0}', space=vmem, size = 0x4000, scoped, tag = 'output window, operand 0']
    #allocation8 [shape = 's32[2]{0}', space=sflag, size = 0x8, scoped, tag = 'scoped memory for tpu_custom_call.1']
    %16 = vsyncpa [#allocation8], 0
    %s17 = scalar_lea.sflag [#allocation8], 1
    %18 = vsyncpa %s17, 0
    loop: start=0, step=1, limit=4
    $region2: #{tpu_custom_call.1} parent=1 // loop_pre_header
      _
    $region3: #{tpu_custom_call.1} parent=1 // loop_header
      %s20 = sphi 0, %s24
      %p21 = scmp.ge.s32.totalorder %s20, 4
      %s30 = sphi 0, %s32
      %s33 = sphi 0, %s30
      %s34 = sphi 0, %s33
      %s50 = sphi 0, %s34
      %s54 = sphi 0, %s54
      %s56 = sphi 0, %s54
      %s57 = sphi 0, %s56
      %s71 = sphi 0, %s57
      %s75 = sphi 0, %s75
      %s77 = sphi 0, %s75
      %s78 = sphi 0, %s77
      %s92 = sphi 0, %s78
      %s96 = sphi 0, %s96
      %s98 = sphi 0, %s96
      %s99 = sphi 0, %s98
      %s113 = sphi 0, %s99
      %s117 = sphi 0, %s117
      %s119 = sphi 0, %s117
      %s120 = sphi 0, %s119
      %s134 = sphi 0, %s120
      %s138 = sphi 0, %s138
      %s140 = sphi 0, %s138
      %s141 = sphi 0, %s140
      %s155 = sphi 0, %s141
      %s159 = sphi 0, %s159
      %s161 = sphi 0, %s159
      %s162 = sphi 0, %s161
      %s176 = sphi 0, %s162
      %s180 = sphi 0, %s180
      %s182 = sphi 0, %s180
      %s183 = sphi 0, %s182
      %s197 = sphi 0, %s183
      %s201 = sphi 0, %s201
      %s203 = sphi 0, %s201
      %s204 = sphi 0, %s203
      %s218 = sphi 0, %s204
      %s222 = sphi 0, %s222
      %s224 = sphi 0, %s222
      %s225 = sphi 0, %s224
      %s239 = sphi 0, %s225
      %s243 = sphi 0, %s243
      %s245 = sphi 0, %s243
      %s246 = sphi 0, %s245
      %s260 = sphi 0, %s246
      %s266 = sphi 0, %s268
      %s269 = sphi 0, %s266
      %s270 = sphi 0, %s269
      %s286 = sphi 0, %s270
    $region4: #{tpu_custom_call.1} parent=1 // loop_header_branch
      %23 = sbr.rel (%p21) target = $region8
    $region5: #{tpu_custom_call.1} parent=1 // loop_body
      %s25 = ssub.s32 %s20, 1
      %s26 = ssub.s32 %s20, 2
      %s27 = sadd.s32 %s20, 1
      %s28 = ssub.s32 %s20, %s27
      %p29 = scmp.eq.s32.totalorder %s28, 0
      %s31 = sadd.s32 %s30, 1
      %s32 = scalar_select %p29, %s30, %s31
      %p35 = pneg %p29
      %p36 = scmp.eq.s32.totalorder %s20, 1
      %p37 = por %p35, %p36
      %p38 = scmp.ne.s32.totalorder %s30, %s33
      %p39 = scmp.eq.s32.totalorder %s20, 0
      %p40 = por %p38, %p39
      %p41 = scmp.ne.s32.totalorder %s30, %s33
      %p42 = scmp.eq.s32.totalorder %s25, 1
      %p43 = por %p41, %p42
      %p44 = scmp.ne.s32.totalorder %s33, %s34
      %p45 = scmp.eq.s32.totalorder %s25, 0
      %p46 = por %p44, %p45
      %p47 = scmp.ne.s32.totalorder %s33, %s34
      %p48 = scmp.eq.s32.totalorder %s26, 1
      %p49 = por %p47, %p48
      %p51 = scmp.ne.s32.totalorder %s34, %s50
      %p52 = scmp.eq.s32.totalorder %s26, 0
      %p53 = por %p51, %p52
      %s55 = sadd.s32 %s54, 1
      %p58 = scmp.eq.s32.totalorder %s20, 1
      %p59 = scmp.ne.s32.totalorder %s54, %s56
      %p60 = scmp.eq.s32.totalorder %s20, 0
      %p61 = por %p59, %p60
      %p62 = scmp.ne.s32.totalorder %s54, %s56
      %p63 = scmp.eq.s32.totalorder %s25, 1
      %p64 = por %p62, %p63
      %p65 = scmp.ne.s32.totalorder %s56, %s57
      %p66 = scmp.eq.s32.totalorder %s25, 0
      %p67 = por %p65, %p66
      %p68 = scmp.ne.s32.totalorder %s56, %s57
      %p69 = scmp.eq.s32.totalorder %s26, 1
      %p70 = por %p68, %p69
      %p72 = scmp.ne.s32.totalorder %s57, %s71
      %p73 = scmp.eq.s32.totalorder %s26, 0
      %p74 = por %p72, %p73
      %s76 = sadd.s32 %s75, 1
      %p79 = scmp.eq.s32.totalorder %s20, 1
      %p80 = scmp.ne.s32.totalorder %s75, %s77
      %p81 = scmp.eq.s32.totalorder %s20, 0
      %p82 = por %p80, %p81
      %p83 = scmp.ne.s32.totalorder %s75, %s77
      %p84 = scmp.eq.s32.totalorder %s25, 1
      %p85 = por %p83, %p84
      %p86 = scmp.ne.s32.totalorder %s77, %s78
      %p87 = scmp.eq.s32.totalorder %s25, 0
      %p88 = por %p86, %p87
      %p89 = scmp.ne.s32.totalorder %s77, %s78
      %p90 = scmp.eq.s32.totalorder %s26, 1
      %p91 = por %p89, %p90
      %p93 = scmp.ne.s32.totalorder %s78, %s92
      %p94 = scmp.eq.s32.totalorder %s26, 0
      %p95 = por %p93, %p94
      %s97 = sadd.s32 %s96, 1
      %p100 = scmp.eq.s32.totalorder %s20, 1
      %p101 = scmp.ne.s32.totalorder %s96, %s98
      %p102 = scmp.eq.s32.totalorder %s20, 0
      %p103 = por %p101, %p102
      %p104 = scmp.ne.s32.totalorder %s96, %s98
      %p105 = scmp.eq.s32.totalorder %s25, 1
      %p106 = por %p104, %p105
      %p107 = scmp.ne.s32.totalorder %s98, %s99
      %p108 = scmp.eq.s32.totalorder %s25, 0
      %p109 = por %p107, %p108
      %p110 = scmp.ne.s32.totalorder %s98, %s99
      %p111 = scmp.eq.s32.totalorder %s26, 1
      %p112 = por %p110, %p111
      %p114 = scmp.ne.s32.totalorder %s99, %s113
      %p115 = scmp.eq.s32.totalorder %s26, 0
      %p116 = por %p114, %p115
      %s118 = sadd.s32 %s117, 1
      %p121 = scmp.eq.s32.totalorder %s20, 1
      %p122 = scmp.ne.s32.totalorder %s117, %s119
      %p123 = scmp.eq.s32.totalorder %s20, 0
      %p124 = por %p122, %p123
      %p125 = scmp.ne.s32.totalorder %s117, %s119
      %p126 = scmp.eq.s32.totalorder %s25, 1
      %p127 = por %p125, %p126
      %p128 = scmp.ne.s32.totalorder %s119, %s120
      %p129 = scmp.eq.s32.totalorder %s25, 0
      %p130 = por %p128, %p129
      %p131 = scmp.ne.s32.totalorder %s119, %s120
      %p132 = scmp.eq.s32.totalorder %s26, 1
      %p133 = por %p131, %p132
      %p135 = scmp.ne.s32.totalorder %s120, %s134
      %p136 = scmp.eq.s32.totalorder %s26, 0
      %p137 = por %p135, %p136
      %s139 = sadd.s32 %s138, 1
      %p142 = scmp.eq.s32.totalorder %s20, 1
      %p143 = scmp.ne.s32.totalorder %s138, %s140
      %p144 = scmp.eq.s32.totalorder %s20, 0
      %p145 = por %p143, %p144
      %p146 = scmp.ne.s32.totalorder %s138, %s140
      %p147 = scmp.eq.s32.totalorder %s25, 1
      %p148 = por %p146, %p147
      %p149 = scmp.ne.s32.totalorder %s140, %s141
      %p150 = scmp.eq.s32.totalorder %s25, 0
      %p151 = por %p149, %p150
      %p152 = scmp.ne.s32.totalorder %s140, %s141
      %p153 = scmp.eq.s32.totalorder %s26, 1
      %p154 = por %p152, %p153
      %p156 = scmp.ne.s32.totalorder %s141, %s155
      %p157 = scmp.eq.s32.totalorder %s26, 0
      %p158 = por %p156, %p157
      %s160 = sadd.s32 %s159, 1
      %p163 = scmp.eq.s32.totalorder %s20, 1
      %p164 = scmp.ne.s32.totalorder %s159, %s161
      %p165 = scmp.eq.s32.totalorder %s20, 0
      %p166 = por %p164, %p165
      %p167 = scmp.ne.s32.totalorder %s159, %s161
      %p168 = scmp.eq.s32.totalorder %s25, 1
      %p169 = por %p167, %p168
      %p170 = scmp.ne.s32.totalorder %s161, %s162
      %p171 = scmp.eq.s32.totalorder %s25, 0
      %p172 = por %p170, %p171
      %p173 = scmp.ne.s32.totalorder %s161, %s162
      %p174 = scmp.eq.s32.totalorder %s26, 1
      %p175 = por %p173, %p174
      %p177 = scmp.ne.s32.totalorder %s162, %s176
      %p178 = scmp.eq.s32.totalorder %s26, 0
      %p179 = por %p177, %p178
      %s181 = sadd.s32 %s180, 1
      %p184 = scmp.eq.s32.totalorder %s20, 1
      %p185 = scmp.ne.s32.totalorder %s180, %s182
      %p186 = scmp.eq.s32.totalorder %s20, 0
      %p187 = por %p185, %p186
      %p188 = scmp.ne.s32.totalorder %s180, %s182
      %p189 = scmp.eq.s32.totalorder %s25, 1
      %p190 = por %p188, %p189
      %p191 = scmp.ne.s32.totalorder %s182, %s183
      %p192 = scmp.eq.s32.totalorder %s25, 0
      %p193 = por %p191, %p192
      %p194 = scmp.ne.s32.totalorder %s182, %s183
      %p195 = scmp.eq.s32.totalorder %s26, 1
      %p196 = por %p194, %p195
      %p198 = scmp.ne.s32.totalorder %s183, %s197
      %p199 = scmp.eq.s32.totalorder %s26, 0
      %p200 = por %p198, %p199
      %s202 = sadd.s32 %s201, 1
      %p205 = scmp.eq.s32.totalorder %s20, 1
      %p206 = scmp.ne.s32.totalorder %s201, %s203
      %p207 = scmp.eq.s32.totalorder %s20, 0
      %p208 = por %p206, %p207
      %p209 = scmp.ne.s32.totalorder %s201, %s203
      %p210 = scmp.eq.s32.totalorder %s25, 1
      %p211 = por %p209, %p210
      %p212 = scmp.ne.s32.totalorder %s203, %s204
      %p213 = scmp.eq.s32.totalorder %s25, 0
      %p214 = por %p212, %p213
      %p215 = scmp.ne.s32.totalorder %s203, %s204
      %p216 = scmp.eq.s32.totalorder %s26, 1
      %p217 = por %p215, %p216
      %p219 = scmp.ne.s32.totalorder %s204, %s218
      %p220 = scmp.eq.s32.totalorder %s26, 0
      %p221 = por %p219, %p220
      %s223 = sadd.s32 %s222, 1
      %p226 = scmp.eq.s32.totalorder %s20, 1
      %p227 = scmp.ne.s32.totalorder %s222, %s224
      %p228 = scmp.eq.s32.totalorder %s20, 0
      %p229 = por %p227, %p228
      %p230 = scmp.ne.s32.totalorder %s222, %s224
      %p231 = scmp.eq.s32.totalorder %s25, 1
      %p232 = por %p230, %p231
      %p233 = scmp.ne.s32.totalorder %s224, %s225
      %p234 = scmp.eq.s32.totalorder %s25, 0
      %p235 = por %p233, %p234
      %p236 = scmp.ne.s32.totalorder %s224, %s225
      %p237 = scmp.eq.s32.totalorder %s26, 1
      %p238 = por %p236, %p237
      %p240 = scmp.ne.s32.totalorder %s225, %s239
      %p241 = scmp.eq.s32.totalorder %s26, 0
      %p242 = por %p240, %p241
      %s244 = sadd.s32 %s243, 1
      %p247 = scmp.eq.s32.totalorder %s20, 1
      %p248 = scmp.ne.s32.totalorder %s243, %s245
      %p249 = scmp.eq.s32.totalorder %s20, 0
      %p250 = por %p248, %p249
      %p251 = scmp.ne.s32.totalorder %s243, %s245
      %p252 = scmp.eq.s32.totalorder %s25, 1
      %p253 = por %p251, %p252
      %p254 = scmp.ne.s32.totalorder %s245, %s246
      %p255 = scmp.eq.s32.totalorder %s25, 0
      %p256 = por %p254, %p255
      %p257 = scmp.ne.s32.totalorder %s245, %s246
      %p258 = scmp.eq.s32.totalorder %s26, 1
      %p259 = por %p257, %p258
      %p261 = scmp.ne.s32.totalorder %s246, %s260
      %p262 = scmp.eq.s32.totalorder %s26, 0
      %p263 = por %p261, %p262
      %s264 = ssub.s32 %s20, %s27
      %p265 = scmp.eq.s32.totalorder %s264, 0
      %s267 = sadd.s32 %s266, 1
      %s268 = scalar_select %p265, %s266, %s267
      %p271 = pneg %p265
      %p272 = scmp.eq.s32.totalorder %s20, 1
      %p273 = por %p271, %p272
      %p274 = scmp.ne.s32.totalorder %s266, %s269
      %p275 = scmp.eq.s32.totalorder %s20, 0
      %p276 = por %p274, %p275
      %p277 = scmp.ne.s32.totalorder %s266, %s269
      %p278 = scmp.eq.s32.totalorder %s25, 1
      %p279 = por %p277, %p278
      %p280 = scmp.ne.s32.totalorder %s269, %s270
      %p281 = scmp.eq.s32.totalorder %s25, 0
      %p282 = por %p280, %p281
      %p283 = scmp.ne.s32.totalorder %s269, %s270
      %p284 = scmp.eq.s32.totalorder %s26, 1
      %p285 = por %p283, %p284
      %p287 = scmp.ne.s32.totalorder %s270, %s286
      %p288 = scmp.eq.s32.totalorder %s26, 0
      %p289 = por %p287, %p288
      %p290 = scmp.le.s32.totalorder 1, %s20
      %p291 = scmp.lt.s32.totalorder %s20, 3
      %p292 = pnand %p290, %p291
      %p293 = pneg %p292
      // Predicated region
      $region9: #{tpu_custom_call.1} parent=5 // pred_check
        _
      $region10: #{tpu_custom_call.1} parent=5 // pred_check_branch
        %295 = sbr.rel (%p292) target = $region12
      $region11: #{tpu_custom_call.1} parent=5 // pred_region
        %s296 = ssub.s32 %s20, 1
        // Predicated region
        $region13: #{tpu_custom_call.1} parent=11 // pred_check
          %p297 = pneg %p67
        $region14: #{tpu_custom_call.1} parent=11 // pred_check_branch
          %299 = sbr.rel (%p297) target = $region16
        $region15: #{tpu_custom_call.1} parent=11 // pred_region
          _
        $region16: #{tpu_custom_call.1} parent=11 // pred_fallthru
          _
        // Predicated region
        $region17: #{tpu_custom_call.1} parent=11 // pred_check
          %p300 = pneg %p88
        $region18: #{tpu_custom_call.1} parent=11 // pred_check_branch
          %302 = sbr.rel (%p300) target = $region20
        $region19: #{tpu_custom_call.1} parent=11 // pred_region
          _
        $region20: #{tpu_custom_call.1} parent=11 // pred_fallthru
          _
        // Predicated region
        $region21: #{tpu_custom_call.1} parent=11 // pred_check
          %p303 = pneg %p109
        $region22: #{tpu_custom_call.1} parent=11 // pred_check_branch
          %305 = sbr.rel (%p303) target = $region24
        $region23: #{tpu_custom_call.1} parent=11 // pred_region
          _
        $region24: #{tpu_custom_call.1} parent=11 // pred_fallthru
          _
        // Predicated region
        $region25: #{tpu_custom_call.1} parent=11 // pred_check
          %p306 = pneg %p130
        $region26: #{tpu_custom_call.1} parent=11 // pred_check_branch
          %308 = sbr.rel (%p306) target = $region28
        $region27: #{tpu_custom_call.1} parent=11 // pred_region
          _
        $region28: #{tpu_custom_call.1} parent=11 // pred_fallthru
          _
        // Predicated region
        $region29: #{tpu_custom_call.1} parent=11 // pred_check
          %p309 = pneg %p151
        $region30: #{tpu_custom_call.1} parent=11 // pred_check_branch
          %311 = sbr.rel (%p309) target = $region32
        $region31: #{tpu_custom_call.1} parent=11 // pred_region
          _
        $region32: #{tpu_custom_call.1} parent=11 // pred_fallthru
          _
        // Predicated region
        $region33: #{tpu_custom_call.1} parent=11 // pred_check
          %p312 = pneg %p172
        $region34: #{tpu_custom_call.1} parent=11 // pred_check_branch
          %314 = sbr.rel (%p312) target = $region36
        $region35: #{tpu_custom_call.1} parent=11 // pred_region
          _
        $region36: #{tpu_custom_call.1} parent=11 // pred_fallthru
          _
        // Predicated region
        $region37: #{tpu_custom_call.1} parent=11 // pred_check
          %p315 = pneg %p193
        $region38: #{tpu_custom_call.1} parent=11 // pred_check_branch
          %317 = sbr.rel (%p315) target = $region40
        $region39: #{tpu_custom_call.1} parent=11 // pred_region
          _
        $region40: #{tpu_custom_call.1} parent=11 // pred_fallthru
          _
        // Predicated region
        $region41: #{tpu_custom_call.1} parent=11 // pred_check
          %p318 = pneg %p214
        $region42: #{tpu_custom_call.1} parent=11 // pred_check_branch
          %320 = sbr.rel (%p318) target = $region44
        $region43: #{tpu_custom_call.1} parent=11 // pred_region
          _
        $region44: #{tpu_custom_call.1} parent=11 // pred_fallthru
          _
        // Predicated region
        $region45: #{tpu_custom_call.1} parent=11 // pred_check
          %p321 = pneg %p235
        $region46: #{tpu_custom_call.1} parent=11 // pred_check_branch
          %323 = sbr.rel (%p321) target = $region48
        $region47: #{tpu_custom_call.1} parent=11 // pred_region
          _
        $region48: #{tpu_custom_call.1} parent=11 // pred_fallthru
          _
        // Predicated region
        $region49: #{tpu_custom_call.1} parent=11 // pred_check
          %p324 = pneg %p256
        $region50: #{tpu_custom_call.1} parent=11 // pred_check_branch
          %326 = sbr.rel (%p324) target = $region52
        $region51: #{tpu_custom_call.1} parent=11 // pred_region
          _
        $region52: #{tpu_custom_call.1} parent=11 // pred_fallthru
          _
      $region12: #{tpu_custom_call.1} parent=5 // pred_fallthru
        _
      %p327 = scmp.lt.s32.totalorder %s20, 2
      // Predicated region
      $region53: #{tpu_custom_call.1} parent=5 // pred_check
        %p328 = pneg %p327
      $region54: #{tpu_custom_call.1} parent=5 // pred_check_branch
        %330 = sbr.rel (%p328) target = $region56
      $region55: #{tpu_custom_call.1} parent=5 // pred_region
        // Predicated region
        $region57: #{tpu_custom_call.1} parent=55 // pred_check
          %p331 = pneg %p40
        $region58: #{tpu_custom_call.1} parent=55 // pred_check_branch
          %333 = sbr.rel (%p331) target = $region60
        $region59: #{tpu_custom_call.1} parent=55 // pred_region
          %s334 = smul.u32 2, %s20
          %p335 = scmp.lt.s32.totalorder %s334, 3
          %s336 = scalar_select %p335, %s334, 3
          %s337 = smul.addr %s336, 4
          %s338 = scalar_lea.vmem %s0, %s337
          %s339 = smul.u32 2, %s20
        $region60: #{tpu_custom_call.1} parent=55 // pred_fallthru
          _
      $region56: #{tpu_custom_call.1} parent=5 // pred_fallthru
        _
      %p340 = scmp.le.s32.totalorder 1, %s20
      %p341 = scmp.lt.s32.totalorder %s20, 3
      %p342 = pnand %p340, %p341
      %p343 = pneg %p342
      // Predicated region
      $region61: #{tpu_custom_call.1} parent=5 // pred_check
        _
      $region62: #{tpu_custom_call.1} parent=5 // pred_check_branch
        %345 = sbr.rel (%p342) target = $region64
      $region63: #{tpu_custom_call.1} parent=5 // pred_region
        %s346 = ssub.s32 %s20, 1
        %s347 = smul.u32 2, %s25
        %p348 = scmp.lt.s32.totalorder %s347, 3
        %s349 = scalar_select %p348, %s347, 3
        %s350 = smul.addr %s349, 4
        %s351 = scalar_lea.vmem %s0, %s350
        %p352 = pneg %p46
        %p353 = pneg %p43
        %p354 = pneg %p67
        %p355 = pneg %p64
        %p356 = pneg %p88
        %p357 = pneg %p85
        %p358 = pneg %p109
        %p359 = pneg %p106
        %p360 = pneg %p130
        %p361 = pneg %p127
        %p362 = pneg %p151
        %p363 = pneg %p148
        %p364 = pneg %p172
        %p365 = pneg %p169
        %p366 = pneg %p193
        %p367 = pneg %p190
        %p368 = pneg %p214
        %p369 = pneg %p211
        %p370 = pneg %p235
        %p371 = pneg %p232
        %p372 = pneg %p256
        %p373 = pneg %p253
        %p374 = pneg %p282
        %p375 = pneg %p279
        %s376 = sand.u32 %s269, 1
        %s377 = scalar_lea.sflag [#allocation8], %s376
        %s378 = sand.u32 %s269, 1
        %s379 = smul.addr %s378, 16
        %s380 = scalar_lea.vmem [#allocation7], %s379
        %s381 = smul.u32 2, %s25
        %p382 = scmp.lt.s32.totalorder %s381, 3
        %s383 = scalar_select %p382, %s381, 3
        %s384 = smul.addr %s383, 4
        %s385 = scalar_lea.vmem %s0, %s384
        %s386 = smul.u32 2, %s25
        %s387 = smul.u32 2, %s25
        %p389 = scmp.eq.s32.totalorder %s25, 0
        // Predicated region
        $region65: #{tpu_custom_call.1} parent=63 // pred_check
          %p390 = pneg %p389
        $region66: #{tpu_custom_call.1} parent=63 // pred_check_branch
          %392 = sbr.rel (%p390) target = $region68
        $region67: #{tpu_custom_call.1} parent=63 // pred_region
          %vm393 = vcmask 254976
          %394 = vst.msk [vmem:[#allocation2] sm:$0x3] %vm393, 0.0
        $region68: #{tpu_custom_call.1} parent=63 // pred_fallthru
          _
        %v395 = vld [vmem:[%s385] sm:$0xf]
        %v396 = vld [vmem:[%s385 + $0x4] sm:$0xf]
        %v397 = vld [vmem:[%s1] sm:$0xf]
        %v398 = vld [vmem:[%s1 + $0x4] sm:$0xf]
        %v399 = vld [vmem:[%s1 + $0x8] sm:$0xf]
        %v400 = vld [vmem:[%s1 + $0xc] sm:$0xf]
        %v401 = vld [vmem:[%s1 + $0x10] sm:$0xf]
        %v402 = vld [vmem:[%s1 + $0x14] sm:$0xf]
        %v403 = vld [vmem:[%s1 + $0x18] sm:$0xf]
        %v404 = vld [vmem:[%s1 + $0x1c] sm:$0xf]
        %v405 = vld [vmem:[%s5] sm:$0x1]
        %v407 = vlaneseq
        %v408 = vshrl.u32 %v407, 7
        %v409 = vsub.s32 0, %v408
        %v410 = vrot.slane %v405, %v409
        %v414 = vunpack.c.l.b16 %v395
        %v415 = vunpack.c.l.b16 %v396
        %v416 = vpack.c.b16 %v415, %v414
        %v425 = vunpack.c.l.b16 %v397
        %v426 = vunpack.c.l.b16 %v398
        %v427 = vunpack.c.l.b16 %v399
        %v428 = vunpack.c.l.b16 %v400
        %v429 = vunpack.c.l.b16 %v401
        %v430 = vunpack.c.l.b16 %v402
        %v431 = vunpack.c.l.b16 %v403
        %v432 = vunpack.c.l.b16 %v404
        %v433 = vpack.c.b16 %v426, %v425
        %v434 = vpack.c.b16 %v428, %v427
        %v435 = vpack.c.b16 %v430, %v429
        %v436 = vpack.c.b16 %v432, %v431
        %vm441 = vcmask 523264
        %v443 = vsel %vm441, %v416, 0
        %445 = vmatprep.subr.bf16.mxu0 0
        %446 = vmatpush1.bf16.msra.mxu0 %v433
        %447 = vmatprep.subr.bf16.mxu0 0
        %448 = vmatpush1.bf16.msra.mxu0 %v434
        %449 = vmatprep.subr.bf16.mxu0 0
        %450 = vmatpush1.bf16.msra.mxu0 %v435
        %451 = vmatprep.subr.bf16.mxu0 0
        %452 = vmatpush1.bf16.msra.mxu0 %v436
        %453 = vmatprep.subr.bf16.mxu0 0
        %454 = vmatpush1.bf16.msra.mxu0 0
        %455 = vmatprep.subr.bf16.mxu0 0
        %456 = vmatpush1.bf16.msra.mxu0 0
        %457 = vmatprep.subr.bf16.mxu0 0
        %458 = vmatpush1.bf16.msra.mxu0 0
        %459 = vmatprep.subr.bf16.mxu0 0
        %460 = vmatpush1.bf16.msra.mxu0 0
        %461 = vmatprep.subr.bf16.mxu0 0
        %462 = vmatpush1.bf16.msra.mxu0 0
        %463 = vmatprep.subr.bf16.mxu0 0
        %464 = vmatpush1.bf16.msra.mxu0 0
        %465 = vmatprep.subr.bf16.mxu0 0
        %466 = vmatpush1.bf16.msra.mxu0 0
        %467 = vmatprep.subr.bf16.mxu0 0
        %468 = vmatpush1.bf16.msra.mxu0 0
        %469 = vmatprep.subr.bf16.mxu0 0
        %470 = vmatpush1.bf16.msra.mxu0 0
        %471 = vmatprep.subr.bf16.mxu0 0
        %472 = vmatpush1.bf16.msra.mxu0 0
        %473 = vmatprep.subr.bf16.mxu0 0
        %474 = vmatpush1.bf16.msra.mxu0 0
        %475 = vmatprep.subr.bf16.mxu0 0
        %476 = vmatpush1.bf16.msra.mxu0 0
        %477 = vmatprep.mubr.bf16.mxu0 0
        %478 = vmatmul.mubr.bf16.gmra.mrb[0].mxu0 %v443
        %v479 = vpop.f32.mrb[0].mxu0
        %v480 = vadd.f32 %v410, %v479
        %v481 = vpop.f32.mrb[0].mxu0
        %v482 = vpop.f32.mrb[0].mxu0
        %v483 = vadd.f32 %v410, %v482
        %v484 = vpop.f32.mrb[0].mxu0
        %485 = vdwg.mxu0
        %vm486 = vcmask 261120
        %487 = vst.msk [vmem:[#allocation3] sm:$0xff] %vm486, %v480
        %488 = vst.msk [vmem:[#allocation3 + $0x8] sm:$0xff] %vm486, %v483
        %v489 = vld [vmem:[%s2] sm:$0xf]
        %v490 = vld [vmem:[%s2 + $0x4] sm:$0xf]
        %v491 = vld [vmem:[%s2 + $0x8] sm:$0xf]
        %v492 = vld [vmem:[%s2 + $0xc] sm:$0xf]
        %v493 = vld [vmem:[%s2 + $0x10] sm:$0xf]
        %v494 = vld [vmem:[%s2 + $0x14] sm:$0xf]
        %v495 = vld [vmem:[%s2 + $0x18] sm:$0xf]
        %v496 = vld [vmem:[%s2 + $0x1c] sm:$0xf]
        %v497 = vld [vmem:[%s6] sm:$0x1]
        %v499 = vlaneseq
        %v500 = vshrl.u32 %v499, 7
        %v501 = vsub.s32 0, %v500
        %v502 = vrot.slane %v497, %v501
        %v512 = vunpack.c.l.b16 %v489
        %v513 = vunpack.c.l.b16 %v490
        %v514 = vunpack.c.l.b16 %v491
        %v515 = vunpack.c.l.b16 %v492
        %v516 = vunpack.c.l.b16 %v493
        %v517 = vunpack.c.l.b16 %v494
        %v518 = vunpack.c.l.b16 %v495
        %v519 = vunpack.c.l.b16 %v496
        %v520 = vpack.c.b16 %v513, %v512
        %v521 = vpack.c.b16 %v515, %v514
        %v522 = vpack.c.b16 %v517, %v516
        %v523 = vpack.c.b16 %v519, %v518
        %528 = vmatprep.subr.bf16.mxu0 0
        %529 = vmatpush1.bf16.msra.mxu0 %v520
        %530 = vmatprep.subr.bf16.mxu0 0
        %531 = vmatpush1.bf16.msra.mxu0 %v521
        %532 = vmatprep.subr.bf16.mxu0 0
        %533 = vmatpush1.bf16.msra.mxu0 %v522
        %534 = vmatprep.subr.bf16.mxu0 0
        %535 = vmatpush1.bf16.msra.mxu0 %v523
        %536 = vmatprep.subr.bf16.mxu0 0
        %537 = vmatpush1.bf16.msra.mxu0 0
        %538 = vmatprep.subr.bf16.mxu0 0
        %539 = vmatpush1.bf16.msra.mxu0 0
        %540 = vmatprep.subr.bf16.mxu0 0
        %541 = vmatpush1.bf16.msra.mxu0 0
        %542 = vmatprep.subr.bf16.mxu0 0
        %543 = vmatpush1.bf16.msra.mxu0 0
        %544 = vmatprep.subr.bf16.mxu0 0
        %545 = vmatpush1.bf16.msra.mxu0 0
        %546 = vmatprep.subr.bf16.mxu0 0
        %547 = vmatpush1.bf16.msra.mxu0 0
        %548 = vmatprep.subr.bf16.mxu0 0
        %549 = vmatpush1.bf16.msra.mxu0 0
        %550 = vmatprep.subr.bf16.mxu0 0
        %551 = vmatpush1.bf16.msra.mxu0 0
        %552 = vmatprep.subr.bf16.mxu0 0
        %553 = vmatpush1.bf16.msra.mxu0 0
        %554 = vmatprep.subr.bf16.mxu0 0
        %555 = vmatpush1.bf16.msra.mxu0 0
        %556 = vmatprep.subr.bf16.mxu0 0
        %557 = vmatpush1.bf16.msra.mxu0 0
        %558 = vmatprep.subr.bf16.mxu0 0
        %559 = vmatpush1.bf16.msra.mxu0 0
        %560 = vmatprep.mubr.bf16.mxu0 0
        %561 = vmatmul.mubr.bf16.gmra.mrb[0].mxu0 %v443
        %v562 = vpop.f32.mrb[0].mxu0
        %v563 = vadd.f32 %v502, %v562
        %v564 = vpop.f32.mrb[0].mxu0
        %v565 = vpop.f32.mrb[0].mxu0
        %v566 = vadd.f32 %v502, %v565
        %v567 = vpop.f32.mrb[0].mxu0
        %568 = vdwg.mxu0
        %569 = vst.msk [vmem:[#allocation4] sm:$0xff] %vm486, %v563
        %570 = vst.msk [vmem:[#allocation4 + $0x8] sm:$0xff] %vm486, %v566
        %v571 = vld [vmem:[%s3] sm:$0xf]
        %v572 = vld [vmem:[%s3 + $0x4] sm:$0xf]
        %v573 = vld [vmem:[%s3 + $0x8] sm:$0xf]
        %v574 = vld [vmem:[%s3 + $0xc] sm:$0xf]
        %v575 = vld [vmem:[%s3 + $0x10] sm:$0xf]
        %v576 = vld [vmem:[%s3 + $0x14] sm:$0xf]
        %v577 = vld [vmem:[%s3 + $0x18] sm:$0xf]
        %v578 = vld [vmem:[%s3 + $0x1c] sm:$0xf]
        %v579 = vld [vmem:[%s7] sm:$0x1]
        %v581 = vlaneseq
        %v582 = vshrl.u32 %v581, 7
        %v583 = vsub.s32 0, %v582
        %v584 = vrot.slane %v579, %v583
        %v594 = vunpack.c.l.b16 %v571
        %v595 = vunpack.c.l.b16 %v572
        %v596 = vunpack.c.l.b16 %v573
        %v597 = vunpack.c.l.b16 %v574
        %v598 = vunpack.c.l.b16 %v575
        %v599 = vunpack.c.l.b16 %v576
        %v600 = vunpack.c.l.b16 %v577
        %v601 = vunpack.c.l.b16 %v578
        %v602 = vpack.c.b16 %v595, %v594
        %v603 = vpack.c.b16 %v597, %v596
        %v604 = vpack.c.b16 %v599, %v598
        %v605 = vpack.c.b16 %v601, %v600
        %610 = vmatprep.subr.bf16.mxu0 0
        %611 = vmatpush1.bf16.msra.mxu0 %v602
        %612 = vmatprep.subr.bf16.mxu0 0
        %613 = vmatpush1.bf16.msra.mxu0 %v603
        %614 = vmatprep.subr.bf16.mxu0 0
        %615 = vmatpush1.bf16.msra.mxu0 %v604
        %616 = vmatprep.subr.bf16.mxu0 0
        %617 = vmatpush1.bf16.msra.mxu0 %v605
        %618 = vmatprep.subr.bf16.mxu0 0
        %619 = vmatpush1.bf16.msra.mxu0 0
        %620 = vmatprep.subr.bf16.mxu0 0
        %621 = vmatpush1.bf16.msra.mxu0 0
        %622 = vmatprep.subr.bf16.mxu0 0
        %623 = vmatpush1.bf16.msra.mxu0 0
        %624 = vmatprep.subr.bf16.mxu0 0
        %625 = vmatpush1.bf16.msra.mxu0 0
        %626 = vmatprep.subr.bf16.mxu0 0
        %627 = vmatpush1.bf16.msra.mxu0 0
        %628 = vmatprep.subr.bf16.mxu0 0
        %629 = vmatpush1.bf16.msra.mxu0 0
        %630 = vmatprep.subr.bf16.mxu0 0
        %631 = vmatpush1.bf16.msra.mxu0 0
        %632 = vmatprep.subr.bf16.mxu0 0
        %633 = vmatpush1.bf16.msra.mxu0 0
        %634 = vmatprep.subr.bf16.mxu0 0
        %635 = vmatpush1.bf16.msra.mxu0 0
        %636 = vmatprep.subr.bf16.mxu0 0
        %637 = vmatpush1.bf16.msra.mxu0 0
        %638 = vmatprep.subr.bf16.mxu0 0
        %639 = vmatpush1.bf16.msra.mxu0 0
        %640 = vmatprep.subr.bf16.mxu0 0
        %641 = vmatpush1.bf16.msra.mxu0 0
        %642 = vmatprep.mubr.bf16.mxu0 0
        %643 = vmatmul.mubr.bf16.gmra.mrb[0].mxu0 %v443
        %v644 = vpop.f32.mrb[0].mxu0
        %v645 = vadd.f32 %v584, %v644
        %v646 = vpop.f32.mrb[0].mxu0
        %v647 = vpop.f32.mrb[0].mxu0
        %v648 = vadd.f32 %v584, %v647
        %v649 = vpop.f32.mrb[0].mxu0
        %650 = vdwg.mxu0
        %651 = vst.msk [vmem:[#allocation5] sm:$0xff] %vm486, %v645
        %652 = vst.msk [vmem:[#allocation5 + $0x8] sm:$0xff] %vm486, %v648
        %v653 = vld [vmem:[%s8] sm:$0x1]
        %v654 = vld [vmem:[%s4] sm:$0xf]
        %v655 = vld [vmem:[%s4 + $0x4] sm:$0xf]
        %v656 = vld [vmem:[%s4 + $0x8] sm:$0xf]
        %v657 = vld [vmem:[%s4 + $0xc] sm:$0xf]
        %v658 = vld [vmem:[#allocation2] sm:$0x3]
        %v659 = vpack.c.bf16 %v658, %v658
        %v664 = vunpack.c.l.b16 %v654
        %v665 = vunpack.c.l.b16 %v655
        %v666 = vunpack.c.l.b16 %v656
        %v667 = vunpack.c.l.b16 %v657
        %v668 = vpack.c.b16 %v665, %v664
        %v669 = vpack.c.b16 %v667, %v666
        %v673 = vsel %vm486, %v659, 0
        %675 = vmatprep.subr.bf16.mxu0 0
        %676 = vmatpush1.bf16.msra.mxu0 %v668
        %677 = vmatprep.subr.bf16.mxu0 0
        %678 = vmatpush1.bf16.msra.mxu0 %v669
        %679 = vmatprep.subr.bf16.mxu0 0
        %680 = vmatpush1.bf16.msra.mxu0 0
        %681 = vmatprep.subr.bf16.mxu0 0
        %682 = vmatpush1.bf16.msra.mxu0 0
        %683 = vmatprep.subr.bf16.mxu0 0
        %684 = vmatpush1.bf16.msra.mxu0 0
        %685 = vmatprep.subr.bf16.mxu0 0
        %686 = vmatpush1.bf16.msra.mxu0 0
        %687 = vmatprep.subr.bf16.mxu0 0
        %688 = vmatpush1.bf16.msra.mxu0 0
        %689 = vmatprep.subr.bf16.mxu0 0
        %690 = vmatpush1.bf16.msra.mxu0 0
        %691 = vmatprep.subr.bf16.mxu0 0
        %692 = vmatpush1.bf16.msra.mxu0 0
        %693 = vmatprep.subr.bf16.mxu0 0
        %694 = vmatpush1.bf16.msra.mxu0 0
        %695 = vmatprep.subr.bf16.mxu0 0
        %696 = vmatpush1.bf16.msra.mxu0 0
        %697 = vmatprep.subr.bf16.mxu0 0
        %698 = vmatpush1.bf16.msra.mxu0 0
        %699 = vmatprep.subr.bf16.mxu0 0
        %700 = vmatpush1.bf16.msra.mxu0 0
        %701 = vmatprep.subr.bf16.mxu0 0
        %702 = vmatpush1.bf16.msra.mxu0 0
        %703 = vmatprep.subr.bf16.mxu0 0
        %704 = vmatpush1.bf16.msra.mxu0 0
        %705 = vmatprep.subr.bf16.mxu0 0
        %706 = vmatpush1.bf16.msra.mxu0 0
        %707 = vmatprep.mubr.bf16.mxu0 0
        %708 = vmatmul.mubr.bf16.gmra.mrb[0].mxu0 %v673
        %v709 = vpop.f32.mrb[0].mxu0
        %v710 = vadd.f32 0.0, %v709
        %v711 = vpop.f32.mrb[0].mxu0
        %v712 = vpop.f32.mrb[0].mxu0
        %v713 = vpop.f32.mrb[0].mxu0
        %714 = vdwg.mxu0
        %v716 = vlaneseq
        %v717 = vshrl.u32 %v716, 7
        %v718 = vsub.s32 0, %v717
        %v719 = vrot.slane %v653, %v718
        %720 = vrot.lane.b32.xlu0 %v719, 64
        %v721 = vpop.permute.xlu0 %720
        %v723 = vadd.f32 %v710, %v721
        %v724 = vld [vmem:[#allocation3] sm:$0x3]
        %v725 = vadd.f32 %v724, %v710
        %v726 = vxor.u32 %v725, 2147483648
        %v727 = vmul.f32 %v726, 1.442695
        %v728 = vpow.pop %v727
        %v729 = vadd.f32 %v728, 1.0
        %v730 = vrcp.pop %v729
        %v731 = vmul.f32 1.0, %v730
        %v732 = vld [vmem:[#allocation4] sm:$0x3]
        %734 = vrot.lane.b32.xlu0 %v710, 96
        %v735 = vpop.permute.xlu0 %734
        %v737 = vadd.f32 %v732, %v735
        %v738 = vxor.u32 %v737, 2147483648
        %v739 = vmul.f32 %v738, 1.442695
        %v740 = vpow.pop %v739
        %v741 = vadd.f32 %v740, 1.0
        %v742 = vrcp.pop %v741
        %v743 = vmul.f32 1.0, %v742
        %v744 = vld [vmem:[#allocation5] sm:$0x3]
        %746 = vrot.lane.b32.xlu0 %v723, 64
        %v747 = vpop.permute.xlu0 %746
        %v749 = vmul.f32 %v731, %v747
        %v750 = vadd.f32 %v744, %v749
        %v751 = vtanh.pop %v750
        %v752 = vsub.f32 1.0, %v743
        %v753 = vmul.f32 %v752, %v751
        %v754 = vmul.f32 %v743, %v658
        %v755 = vadd.f32 %v753, %v754
        %vm756 = vcmask 254976
        %757 = vst.msk [vmem:[#allocation6] sm:$0x3] %vm756, %v755
        %v758 = vpack.c.bf16 %v755, %v755
        %v760 = vsel %vm486, %v758, 0
        %762 = vmatprep.subr.bf16.mxu0 0
        %763 = vmatpush1.bf16.msra.mxu0 %v668
        %764 = vmatprep.subr.bf16.mxu0 0
        %765 = vmatpush1.bf16.msra.mxu0 %v669
        %766 = vmatprep.subr.bf16.mxu0 0
        %767 = vmatpush1.bf16.msra.mxu0 0
        %768 = vmatprep.subr.bf16.mxu0 0
        %769 = vmatpush1.bf16.msra.mxu0 0
        %770 = vmatprep.subr.bf16.mxu0 0
        %771 = vmatpush1.bf16.msra.mxu0 0
        %772 = vmatprep.subr.bf16.mxu0 0
        %773 = vmatpush1.bf16.msra.mxu0 0
        %774 = vmatprep.subr.bf16.mxu0 0
        %775 = vmatpush1.bf16.msra.mxu0 0
        %776 = vmatprep.subr.bf16.mxu0 0
        %777 = vmatpush1.bf16.msra.mxu0 0
        %778 = vmatprep.subr.bf16.mxu0 0
        %779 = vmatpush1.bf16.msra.mxu0 0
        %780 = vmatprep.subr.bf16.mxu0 0
        %781 = vmatpush1.bf16.msra.mxu0 0
        %782 = vmatprep.subr.bf16.mxu0 0
        %783 = vmatpush1.bf16.msra.mxu0 0
        %784 = vmatprep.subr.bf16.mxu0 0
        %785 = vmatpush1.bf16.msra.mxu0 0
        %786 = vmatprep.subr.bf16.mxu0 0
        %787 = vmatpush1.bf16.msra.mxu0 0
        %788 = vmatprep.subr.bf16.mxu0 0
        %789 = vmatpush1.bf16.msra.mxu0 0
        %790 = vmatprep.subr.bf16.mxu0 0
        %791 = vmatpush1.bf16.msra.mxu0 0
        %792 = vmatprep.subr.bf16.mxu0 0
        %793 = vmatpush1.bf16.msra.mxu0 0
        %794 = vmatprep.mubr.bf16.mxu0 0
        %795 = vmatmul.mubr.bf16.gmra.mrb[0].mxu0 %v760
        %v796 = vpop.f32.mrb[0].mxu0
        %v797 = vadd.f32 0.0, %v796
        %v798 = vpop.f32.mrb[0].mxu0
        %v799 = vpop.f32.mrb[0].mxu0
        %v800 = vpop.f32.mrb[0].mxu0
        %801 = vdwg.mxu0
        %v802 = vadd.f32 %v797, %v721
        %v803 = vld [vmem:[#allocation3 + $0x2] sm:$0x3]
        %v804 = vadd.f32 %v803, %v797
        %v805 = vxor.u32 %v804, 2147483648
        %v806 = vmul.f32 %v805, 1.442695
        %v807 = vpow.pop %v806
        %v808 = vadd.f32 %v807, 1.0
        %v809 = vrcp.pop %v808
        %v810 = vmul.f32 1.0, %v809
        %v811 = vld [vmem:[#allocation4 + $0x2] sm:$0x3]
        %813 = vrot.lane.b32.xlu0 %v797, 96
        %v814 = vpop.permute.xlu0 %813
        %v816 = vadd.f32 %v811, %v814
        %v817 = vxor.u32 %v816, 2147483648
        %v818 = vmul.f32 %v817, 1.442695
        %v819 = vpow.pop %v818
        %v820 = vadd.f32 %v819, 1.0
        %v821 = vrcp.pop %v820
        %v822 = vmul.f32 1.0, %v821
        %v823 = vld [vmem:[#allocation5 + $0x2] sm:$0x3]
        %825 = vrot.lane.b32.xlu0 %v802, 64
        %v826 = vpop.permute.xlu0 %825
        %v828 = vmul.f32 %v810, %v826
        %v829 = vadd.f32 %v823, %v828
        %v830 = vtanh.pop %v829
        %v831 = vsub.f32 1.0, %v822
        %v832 = vmul.f32 %v831, %v830
        %v833 = vmul.f32 %v822, %v755
        %v834 = vadd.f32 %v832, %v833
        %835 = vst.msk [vmem:[#allocation6 + $0x2] sm:$0x3] %vm756, %v834
        %v836 = vpack.c.bf16 %v834, %v834
        %v838 = vsel %vm486, %v836, 0
        %840 = vmatprep.subr.bf16.mxu0 0
        %841 = vmatpush1.bf16.msra.mxu0 %v668
        %842 = vmatprep.subr.bf16.mxu0 0
        %843 = vmatpush1.bf16.msra.mxu0 %v669
        %844 = vmatprep.subr.bf16.mxu0 0
        %845 = vmatpush1.bf16.msra.mxu0 0
        %846 = vmatprep.subr.bf16.mxu0 0
        %847 = vmatpush1.bf16.msra.mxu0 0
        %848 = vmatprep.subr.bf16.mxu0 0
        %849 = vmatpush1.bf16.msra.mxu0 0
        %850 = vmatprep.subr.bf16.mxu0 0
        %851 = vmatpush1.bf16.msra.mxu0 0
        %852 = vmatprep.subr.bf16.mxu0 0
        %853 = vmatpush1.bf16.msra.mxu0 0
        %854 = vmatprep.subr.bf16.mxu0 0
        %855 = vmatpush1.bf16.msra.mxu0 0
        %856 = vmatprep.subr.bf16.mxu0 0
        %857 = vmatpush1.bf16.msra.mxu0 0
        %858 = vmatprep.subr.bf16.mxu0 0
        %859 = vmatpush1.bf16.msra.mxu0 0
        %860 = vmatprep.subr.bf16.mxu0 0
        %861 = vmatpush1.bf16.msra.mxu0 0
        %862 = vmatprep.subr.bf16.mxu0 0
        %863 = vmatpush1.bf16.msra.mxu0 0
        %864 = vmatprep.subr.bf16.mxu0 0
        %865 = vmatpush1.bf16.msra.mxu0 0
        %866 = vmatprep.subr.bf16.mxu0 0
        %867 = vmatpush1.bf16.msra.mxu0 0
        %868 = vmatprep.subr.bf16.mxu0 0
        %869 = vmatpush1.bf16.msra.mxu0 0
        %870 = vmatprep.subr.bf16.mxu0 0
        %871 = vmatpush1.bf16.msra.mxu0 0
        %872 = vmatprep.mubr.bf16.mxu0 0
        %873 = vmatmul.mubr.bf16.gmra.mrb[0].mxu0 %v838
        %v874 = vpop.f32.mrb[0].mxu0
        %v875 = vadd.f32 0.0, %v874
        %v876 = vpop.f32.mrb[0].mxu0
        %v877 = vpop.f32.mrb[0].mxu0
        %v878 = vpop.f32.mrb[0].mxu0
        %879 = vdwg.mxu0
        %v880 = vadd.f32 %v875, %v721
        %v881 = vld [vmem:[#allocation3 + $0x4] sm:$0x3]
        %v882 = vadd.f32 %v881, %v875
        %v883 = vxor.u32 %v882, 2147483648
        %v884 = vmul.f32 %v883, 1.442695
        %v885 = vpow.pop %v884
        %v886 = vadd.f32 %v885, 1.0
        %v887 = vrcp.pop %v886
        %v888 = vmul.f32 1.0, %v887
        %v889 = vld [vmem:[#allocation4 + $0x4] sm:$0x3]
        %891 = vrot.lane.b32.xlu0 %v875, 96
        %v892 = vpop.permute.xlu0 %891
        %v894 = vadd.f32 %v889, %v892
        %v895 = vxor.u32 %v894, 2147483648
        %v896 = vmul.f32 %v895, 1.442695
        %v897 = vpow.pop %v896
        %v898 = vadd.f32 %v897, 1.0
        %v899 = vrcp.pop %v898
        %v900 = vmul.f32 1.0, %v899
        %v901 = vld [vmem:[#allocation5 + $0x4] sm:$0x3]
        %903 = vrot.lane.b32.xlu0 %v880, 64
        %v904 = vpop.permute.xlu0 %903
        %v906 = vmul.f32 %v888, %v904
        %v907 = vadd.f32 %v901, %v906
        %v908 = vtanh.pop %v907
        %v909 = vsub.f32 1.0, %v900
        %v910 = vmul.f32 %v909, %v908
        %v911 = vmul.f32 %v900, %v834
        %v912 = vadd.f32 %v910, %v911
        %913 = vst.msk [vmem:[#allocation6 + $0x4] sm:$0x3] %vm756, %v912
        %v914 = vpack.c.bf16 %v912, %v912
        %v916 = vsel %vm486, %v914, 0
        %918 = vmatprep.subr.bf16.mxu0 0
        %919 = vmatpush1.bf16.msra.mxu0 %v668
        %920 = vmatprep.subr.bf16.mxu0 0
        %921 = vmatpush1.bf16.msra.mxu0 %v669
        %922 = vmatprep.subr.bf16.mxu0 0
        %923 = vmatpush1.bf16.msra.mxu0 0
        %924 = vmatprep.subr.bf16.mxu0 0
        %925 = vmatpush1.bf16.msra.mxu0 0
        %926 = vmatprep.subr.bf16.mxu0 0
        %927 = vmatpush1.bf16.msra.mxu0 0
        %928 = vmatprep.subr.bf16.mxu0 0
        %929 = vmatpush1.bf16.msra.mxu0 0
        %930 = vmatprep.subr.bf16.mxu0 0
        %931 = vmatpush1.bf16.msra.mxu0 0
        %932 = vmatprep.subr.bf16.mxu0 0
        %933 = vmatpush1.bf16.msra.mxu0 0
        %934 = vmatprep.subr.bf16.mxu0 0
        %935 = vmatpush1.bf16.msra.mxu0 0
        %936 = vmatprep.subr.bf16.mxu0 0
        %937 = vmatpush1.bf16.msra.mxu0 0
        %938 = vmatprep.subr.bf16.mxu0 0
        %939 = vmatpush1.bf16.msra.mxu0 0
        %940 = vmatprep.subr.bf16.mxu0 0
        %941 = vmatpush1.bf16.msra.mxu0 0
        %942 = vmatprep.subr.bf16.mxu0 0
        %943 = vmatpush1.bf16.msra.mxu0 0
        %944 = vmatprep.subr.bf16.mxu0 0
        %945 = vmatpush1.bf16.msra.mxu0 0
        %946 = vmatprep.subr.bf16.mxu0 0
        %947 = vmatpush1.bf16.msra.mxu0 0
        %948 = vmatprep.subr.bf16.mxu0 0
        %949 = vmatpush1.bf16.msra.mxu0 0
        %950 = vmatprep.mubr.bf16.mxu0 0
        %951 = vmatmul.mubr.bf16.gmra.mrb[0].mxu0 %v916
        %v952 = vpop.f32.mrb[0].mxu0
        %v953 = vadd.f32 0.0, %v952
        %v954 = vpop.f32.mrb[0].mxu0
        %v955 = vpop.f32.mrb[0].mxu0
        %v956 = vpop.f32.mrb[0].mxu0
        %957 = vdwg.mxu0
        %v958 = vadd.f32 %v953, %v721
        %v959 = vld [vmem:[#allocation3 + $0x6] sm:$0x3]
        %v960 = vadd.f32 %v959, %v953
        %v961 = vxor.u32 %v960, 2147483648
        %v962 = vmul.f32 %v961, 1.442695
        %v963 = vpow.pop %v962
        %v964 = vadd.f32 %v963, 1.0
        %v965 = vrcp.pop %v964
        %v966 = vmul.f32 1.0, %v965
        %v967 = vld [vmem:[#allocation4 + $0x6] sm:$0x3]
        %969 = vrot.lane.b32.xlu0 %v953, 96
        %v970 = vpop.permute.xlu0 %969
        %v972 = vadd.f32 %v967, %v970
        %v973 = vxor.u32 %v972, 2147483648
        %v974 = vmul.f32 %v973, 1.442695
        %v975 = vpow.pop %v974
        %v976 = vadd.f32 %v975, 1.0
        %v977 = vrcp.pop %v976
        %v978 = vmul.f32 1.0, %v977
        %v979 = vld [vmem:[#allocation5 + $0x6] sm:$0x3]
        %981 = vrot.lane.b32.xlu0 %v958, 64
        %v982 = vpop.permute.xlu0 %981
        %v984 = vmul.f32 %v966, %v982
        %v985 = vadd.f32 %v979, %v984
        %v986 = vtanh.pop %v985
        %v987 = vsub.f32 1.0, %v978
        %v988 = vmul.f32 %v987, %v986
        %v989 = vmul.f32 %v978, %v912
        %v990 = vadd.f32 %v988, %v989
        %991 = vst.msk [vmem:[#allocation6 + $0x6] sm:$0x3] %vm756, %v990
        %v992 = vpack.c.bf16 %v990, %v990
        %v994 = vsel %vm486, %v992, 0
        %996 = vmatprep.subr.bf16.mxu0 0
        %997 = vmatpush1.bf16.msra.mxu0 %v668
        %998 = vmatprep.subr.bf16.mxu0 0
        %999 = vmatpush1.bf16.msra.mxu0 %v669
        %1000 = vmatprep.subr.bf16.mxu0 0
        %1001 = vmatpush1.bf16.msra.mxu0 0
        %1002 = vmatprep.subr.bf16.mxu0 0
        %1003 = vmatpush1.bf16.msra.mxu0 0
        %1004 = vmatprep.subr.bf16.mxu0 0
        %1005 = vmatpush1.bf16.msra.mxu0 0
        %1006 = vmatprep.subr.bf16.mxu0 0
        %1007 = vmatpush1.bf16.msra.mxu0 0
        %1008 = vmatprep.subr.bf16.mxu0 0
        %1009 = vmatpush1.bf16.msra.mxu0 0
        %1010 = vmatprep.subr.bf16.mxu0 0
        %1011 = vmatpush1.bf16.msra.mxu0 0
        %1012 = vmatprep.subr.bf16.mxu0 0
        %1013 = vmatpush1.bf16.msra.mxu0 0
        %1014 = vmatprep.subr.bf16.mxu0 0
        %1015 = vmatpush1.bf16.msra.mxu0 0
        %1016 = vmatprep.subr.bf16.mxu0 0
        %1017 = vmatpush1.bf16.msra.mxu0 0
        %1018 = vmatprep.subr.bf16.mxu0 0
        %1019 = vmatpush1.bf16.msra.mxu0 0
        %1020 = vmatprep.subr.bf16.mxu0 0
        %1021 = vmatpush1.bf16.msra.mxu0 0
        %1022 = vmatprep.subr.bf16.mxu0 0
        %1023 = vmatpush1.bf16.msra.mxu0 0
        %1024 = vmatprep.subr.bf16.mxu0 0
        %1025 = vmatpush1.bf16.msra.mxu0 0
        %1026 = vmatprep.subr.bf16.mxu0 0
        %1027 = vmatpush1.bf16.msra.mxu0 0
        %1028 = vmatprep.mubr.bf16.mxu0 0
        %1029 = vmatmul.mubr.bf16.gmra.mrb[0].mxu0 %v994
        %v1030 = vpop.f32.mrb[0].mxu0
        %v1031 = vadd.f32 0.0, %v1030
        %v1032 = vpop.f32.mrb[0].mxu0
        %v1033 = vpop.f32.mrb[0].mxu0
        %v1034 = vpop.f32.mrb[0].mxu0
        %1035 = vdwg.mxu0
        %v1036 = vadd.f32 %v1031, %v721
        %v1037 = vld [vmem:[#allocation3 + $0x8] sm:$0x3]
        %v1038 = vadd.f32 %v1037, %v1031
        %v1039 = vxor.u32 %v1038, 2147483648
        %v1040 = vmul.f32 %v1039, 1.442695
        %v1041 = vpow.pop %v1040
        %v1042 = vadd.f32 %v1041, 1.0
        %v1043 = vrcp.pop %v1042
        %v1044 = vmul.f32 1.0, %v1043
        %v1045 = vld [vmem:[#allocation4 + $0x8] sm:$0x3]
        %1047 = vrot.lane.b32.xlu0 %v1031, 96
        %v1048 = vpop.permute.xlu0 %1047
        %v1050 = vadd.f32 %v1045, %v1048
        %v1051 = vxor.u32 %v1050, 2147483648
        %v1052 = vmul.f32 %v1051, 1.442695
        %v1053 = vpow.pop %v1052
        %v1054 = vadd.f32 %v1053, 1.0
        %v1055 = vrcp.pop %v1054
        %v1056 = vmul.f32 1.0, %v1055
        %v1057 = vld [vmem:[#allocation5 + $0x8] sm:$0x3]
        %1059 = vrot.lane.b32.xlu0 %v1036, 64
        %v1060 = vpop.permute.xlu0 %1059
        %v1062 = vmul.f32 %v1044, %v1060
        %v1063 = vadd.f32 %v1057, %v1062
        %v1064 = vtanh.pop %v1063
        %v1065 = vsub.f32 1.0, %v1056
        %v1066 = vmul.f32 %v1065, %v1064
        %v1067 = vmul.f32 %v1056, %v990
        %v1068 = vadd.f32 %v1066, %v1067
        %1069 = vst.msk [vmem:[#allocation6 + $0x8] sm:$0x3] %vm756, %v1068
        %v1070 = vpack.c.bf16 %v1068, %v1068
        %v1072 = vsel %vm486, %v1070, 0
        %1074 = vmatprep.subr.bf16.mxu0 0
        %1075 = vmatpush1.bf16.msra.mxu0 %v668
        %1076 = vmatprep.subr.bf16.mxu0 0
        %1077 = vmatpush1.bf16.msra.mxu0 %v669
        %1078 = vmatprep.subr.bf16.mxu0 0
        %1079 = vmatpush1.bf16.msra.mxu0 0
        %1080 = vmatprep.subr.bf16.mxu0 0
        %1081 = vmatpush1.bf16.msra.mxu0 0
        %1082 = vmatprep.subr.bf16.mxu0 0
        %1083 = vmatpush1.bf16.msra.mxu0 0
        %1084 = vmatprep.subr.bf16.mxu0 0
        %1085 = vmatpush1.bf16.msra.mxu0 0
        %1086 = vmatprep.subr.bf16.mxu0 0
        %1087 = vmatpush1.bf16.msra.mxu0 0
        %1088 = vmatprep.subr.bf16.mxu0 0
        %1089 = vmatpush1.bf16.msra.mxu0 0
        %1090 = vmatprep.subr.bf16.mxu0 0
        %1091 = vmatpush1.bf16.msra.mxu0 0
        %1092 = vmatprep.subr.bf16.mxu0 0
        %1093 = vmatpush1.bf16.msra.mxu0 0
        %1094 = vmatprep.subr.bf16.mxu0 0
        %1095 = vmatpush1.bf16.msra.mxu0 0
        %1096 = vmatprep.subr.bf16.mxu0 0
        %1097 = vmatpush1.bf16.msra.mxu0 0
        %1098 = vmatprep.subr.bf16.mxu0 0
        %1099 = vmatpush1.bf16.msra.mxu0 0
        %1100 = vmatprep.subr.bf16.mxu0 0
        %1101 = vmatpush1.bf16.msra.mxu0 0
        %1102 = vmatprep.subr.bf16.mxu0 0
        %1103 = vmatpush1.bf16.msra.mxu0 0
        %1104 = vmatprep.subr.bf16.mxu0 0
        %1105 = vmatpush1.bf16.msra.mxu0 0
        %1106 = vmatprep.mubr.bf16.mxu0 0
        %1107 = vmatmul.mubr.bf16.gmra.mrb[0].mxu0 %v1072
        %v1108 = vpop.f32.mrb[0].mxu0
        %v1109 = vadd.f32 0.0, %v1108
        %v1110 = vpop.f32.mrb[0].mxu0
        %v1111 = vpop.f32.mrb[0].mxu0
        %v1112 = vpop.f32.mrb[0].mxu0
        %1113 = vdwg.mxu0
        %v1114 = vadd.f32 %v1109, %v721
        %v1115 = vld [vmem:[#allocation3 + $0xa] sm:$0x3]
        %v1116 = vadd.f32 %v1115, %v1109
        %v1117 = vxor.u32 %v1116, 2147483648
        %v1118 = vmul.f32 %v1117, 1.442695
        %v1119 = vpow.pop %v1118
        %v1120 = vadd.f32 %v1119, 1.0
        %v1121 = vrcp.pop %v1120
        %v1122 = vmul.f32 1.0, %v1121
        %v1123 = vld [vmem:[#allocation4 + $0xa] sm:$0x3]
        %1125 = vrot.lane.b32.xlu0 %v1109, 96
        %v1126 = vpop.permute.xlu0 %1125
        %v1128 = vadd.f32 %v1123, %v1126
        %v1129 = vxor.u32 %v1128, 2147483648
        %v1130 = vmul.f32 %v1129, 1.442695
        %v1131 = vpow.pop %v1130
        %v1132 = vadd.f32 %v1131, 1.0
        %v1133 = vrcp.pop %v1132
        %v1134 = vmul.f32 1.0, %v1133
        %v1135 = vld [vmem:[#allocation5 + $0xa] sm:$0x3]
        %1137 = vrot.lane.b32.xlu0 %v1114, 64
        %v1138 = vpop.permute.xlu0 %1137
        %v1140 = vmul.f32 %v1122, %v1138
        %v1141 = vadd.f32 %v1135, %v1140
        %v1142 = vtanh.pop %v1141
        %v1143 = vsub.f32 1.0, %v1134
        %v1144 = vmul.f32 %v1143, %v1142
        %v1145 = vmul.f32 %v1134, %v1068
        %v1146 = vadd.f32 %v1144, %v1145
        %1147 = vst.msk [vmem:[#allocation6 + $0xa] sm:$0x3] %vm756, %v1146
        %v1148 = vpack.c.bf16 %v1146, %v1146
        %v1150 = vsel %vm486, %v1148, 0
        %1152 = vmatprep.subr.bf16.mxu0 0
        %1153 = vmatpush1.bf16.msra.mxu0 %v668
        %1154 = vmatprep.subr.bf16.mxu0 0
        %1155 = vmatpush1.bf16.msra.mxu0 %v669
        %1156 = vmatprep.subr.bf16.mxu0 0
        %1157 = vmatpush1.bf16.msra.mxu0 0
        %1158 = vmatprep.subr.bf16.mxu0 0
        %1159 = vmatpush1.bf16.msra.mxu0 0
        %1160 = vmatprep.subr.bf16.mxu0 0
        %1161 = vmatpush1.bf16.msra.mxu0 0
        %1162 = vmatprep.subr.bf16.mxu0 0
        %1163 = vmatpush1.bf16.msra.mxu0 0
        %1164 = vmatprep.subr.bf16.mxu0 0
        %1165 = vmatpush1.bf16.msra.mxu0 0
        %1166 = vmatprep.subr.bf16.mxu0 0
        %1167 = vmatpush1.bf16.msra.mxu0 0
        %1168 = vmatprep.subr.bf16.mxu0 0
        %1169 = vmatpush1.bf16.msra.mxu0 0
        %1170 = vmatprep.subr.bf16.mxu0 0
        %1171 = vmatpush1.bf16.msra.mxu0 0
        %1172 = vmatprep.subr.bf16.mxu0 0
        %1173 = vmatpush1.bf16.msra.mxu0 0
        %1174 = vmatprep.subr.bf16.mxu0 0
        %1175 = vmatpush1.bf16.msra.mxu0 0
        %1176 = vmatprep.subr.bf16.mxu0 0
        %1177 = vmatpush1.bf16.msra.mxu0 0
        %1178 = vmatprep.subr.bf16.mxu0 0
        %1179 = vmatpush1.bf16.msra.mxu0 0
        %1180 = vmatprep.subr.bf16.mxu0 0
        %1181 = vmatpush1.bf16.msra.mxu0 0
        %1182 = vmatprep.subr.bf16.mxu0 0
        %1183 = vmatpush1.bf16.msra.mxu0 0
        %1184 = vmatprep.mubr.bf16.mxu0 0
        %1185 = vmatmul.mubr.bf16.gmra.mrb[0].mxu0 %v1150
        %v1186 = vpop.f32.mrb[0].mxu0
        %v1187 = vadd.f32 0.0, %v1186
        %v1188 = vpop.f32.mrb[0].mxu0
        %v1189 = vpop.f32.mrb[0].mxu0
        %v1190 = vpop.f32.mrb[0].mxu0
        %1191 = vdwg.mxu0
        %v1192 = vadd.f32 %v1187, %v721
        %v1193 = vld [vmem:[#allocation3 + $0xc] sm:$0x3]
        %v1194 = vadd.f32 %v1193, %v1187
        %v1195 = vxor.u32 %v1194, 2147483648
        %v1196 = vmul.f32 %v1195, 1.442695
        %v1197 = vpow.pop %v1196
        %v1198 = vadd.f32 %v1197, 1.0
        %v1199 = vrcp.pop %v1198
        %v1200 = vmul.f32 1.0, %v1199
        %v1201 = vld [vmem:[#allocation4 + $0xc] sm:$0x3]
        %1203 = vrot.lane.b32.xlu0 %v1187, 96
        %v1204 = vpop.permute.xlu0 %1203
        %v1206 = vadd.f32 %v1201, %v1204
        %v1207 = vxor.u32 %v1206, 2147483648
        %v1208 = vmul.f32 %v1207, 1.442695
        %v1209 = vpow.pop %v1208
        %v1210 = vadd.f32 %v1209, 1.0
        %v1211 = vrcp.pop %v1210
        %v1212 = vmul.f32 1.0, %v1211
        %v1213 = vld [vmem:[#allocation5 + $0xc] sm:$0x3]
        %1215 = vrot.lane.b32.xlu0 %v1192, 64
        %v1216 = vpop.permute.xlu0 %1215
        %v1218 = vmul.f32 %v1200, %v1216
        %v1219 = vadd.f32 %v1213, %v1218
        %v1220 = vtanh.pop %v1219
        %v1221 = vsub.f32 1.0, %v1212
        %v1222 = vmul.f32 %v1221, %v1220
        %v1223 = vmul.f32 %v1212, %v1146
        %v1224 = vadd.f32 %v1222, %v1223
        %1225 = vst.msk [vmem:[#allocation6 + $0xc] sm:$0x3] %vm756, %v1224
        %v1226 = vpack.c.bf16 %v1224, %v1224
        %v1228 = vsel %vm486, %v1226, 0
        %1230 = vmatprep.subr.bf16.mxu0 0
        %1231 = vmatpush1.bf16.msra.mxu0 %v668
        %1232 = vmatprep.subr.bf16.mxu0 0
        %1233 = vmatpush1.bf16.msra.mxu0 %v669
        %1234 = vmatprep.subr.bf16.mxu0 0
        %1235 = vmatpush1.bf16.msra.mxu0 0
        %1236 = vmatprep.subr.bf16.mxu0 0
        %1237 = vmatpush1.bf16.msra.mxu0 0
        %1238 = vmatprep.subr.bf16.mxu0 0
        %1239 = vmatpush1.bf16.msra.mxu0 0
        %1240 = vmatprep.subr.bf16.mxu0 0
        %1241 = vmatpush1.bf16.msra.mxu0 0
        %1242 = vmatprep.subr.bf16.mxu0 0
        %1243 = vmatpush1.bf16.msra.mxu0 0
        %1244 = vmatprep.subr.bf16.mxu0 0
        %1245 = vmatpush1.bf16.msra.mxu0 0
        %1246 = vmatprep.subr.bf16.mxu0 0
        %1247 = vmatpush1.bf16.msra.mxu0 0
        %1248 = vmatprep.subr.bf16.mxu0 0
        %1249 = vmatpush1.bf16.msra.mxu0 0
        %1250 = vmatprep.subr.bf16.mxu0 0
        %1251 = vmatpush1.bf16.msra.mxu0 0
        %1252 = vmatprep.subr.bf16.mxu0 0
        %1253 = vmatpush1.bf16.msra.mxu0 0
        %1254 = vmatprep.subr.bf16.mxu0 0
        %1255 = vmatpush1.bf16.msra.mxu0 0
        %1256 = vmatprep.subr.bf16.mxu0 0
        %1257 = vmatpush1.bf16.msra.mxu0 0
        %1258 = vmatprep.subr.bf16.mxu0 0
        %1259 = vmatpush1.bf16.msra.mxu0 0
        %1260 = vmatprep.subr.bf16.mxu0 0
        %1261 = vmatpush1.bf16.msra.mxu0 0
        %1262 = vmatprep.mubr.bf16.mxu0 0
        %1263 = vmatmul.mubr.bf16.gmra.mrb[0].mxu0 %v1228
        %v1264 = vpop.f32.mrb[0].mxu0
        %v1265 = vadd.f32 0.0, %v1264
        %v1266 = vpop.f32.mrb[0].mxu0
        %v1267 = vpop.f32.mrb[0].mxu0
        %v1268 = vpop.f32.mrb[0].mxu0
        %1269 = vdwg.mxu0
        %v1270 = vadd.f32 %v1265, %v721
        %v1271 = vld [vmem:[#allocation3 + $0xe] sm:$0x3]
        %v1272 = vadd.f32 %v1271, %v1265
        %v1273 = vxor.u32 %v1272, 2147483648
        %v1274 = vmul.f32 %v1273, 1.442695
        %v1275 = vpow.pop %v1274
        %v1276 = vadd.f32 %v1275, 1.0
        %v1277 = vrcp.pop %v1276
        %v1278 = vmul.f32 1.0, %v1277
        %v1279 = vld [vmem:[#allocation4 + $0xe] sm:$0x3]
        %1281 = vrot.lane.b32.xlu0 %v1265, 96
        %v1282 = vpop.permute.xlu0 %1281
        %v1284 = vadd.f32 %v1279, %v1282
        %v1285 = vxor.u32 %v1284, 2147483648
        %v1286 = vmul.f32 %v1285, 1.442695
        %v1287 = vpow.pop %v1286
        %v1288 = vadd.f32 %v1287, 1.0
        %v1289 = vrcp.pop %v1288
        %v1290 = vmul.f32 1.0, %v1289
        %v1291 = vld [vmem:[#allocation5 + $0xe] sm:$0x3]
        %1293 = vrot.lane.b32.xlu0 %v1270, 64
        %v1294 = vpop.permute.xlu0 %1293
        %v1296 = vmul.f32 %v1278, %v1294
        %v1297 = vadd.f32 %v1291, %v1296
        %v1298 = vtanh.pop %v1297
        %v1299 = vsub.f32 1.0, %v1290
        %v1300 = vmul.f32 %v1299, %v1298
        %v1301 = vmul.f32 %v1290, %v1224
        %v1302 = vadd.f32 %v1300, %v1301
        %1303 = vst.msk [vmem:[#allocation6 + $0xe] sm:$0x3] %vm756, %v1302
        %1304 = vst.msk [vmem:[#allocation2] sm:$0x3] %vm756, %v1302
        %v1305 = vld [vmem:[#allocation6] sm:$0xff]
        %v1306 = vld [vmem:[#allocation6 + $0x8] sm:$0xff]
        %v1307 = vpack.c.bf16 %v1306, %v1305
        %v1308 = vld [vmem:[%s9] sm:$0xf]
        %v1309 = vld [vmem:[%s9 + $0x4] sm:$0xf]
        %v1310 = vld [vmem:[%s9 + $0x8] sm:$0xf]
        %v1311 = vld [vmem:[%s9 + $0xc] sm:$0xf]
        %v1312 = vld [vmem:[%s10] sm:$0x1]
        %v1314 = vlaneseq
        %v1315 = vshrl.u32 %v1314, 7
        %v1316 = vsub.s32 0, %v1315
        %v1317 = vrot.slane %v1312, %v1316
        %v1323 = vunpack.c.l.b16 %v1308
        %v1324 = vunpack.c.l.b16 %v1309
        %v1325 = vunpack.c.l.b16 %v1310
        %v1326 = vunpack.c.l.b16 %v1311
        %v1327 = vpack.c.b16 %v1324, %v1323
        %v1328 = vpack.c.b16 %v1326, %v1325
        %v1332 = vsel %vm486, %v1307, 0
        %1334 = vmatprep.subr.bf16.mxu0 0
        %1335 = vmatpush1.bf16.msra.mxu0 %v1327
        %1336 = vmatprep.subr.bf16.mxu0 0
        %1337 = vmatpush1.bf16.msra.mxu0 %v1328
        %1338 = vmatprep.subr.bf16.mxu0 0
        %1339 = vmatpush1.bf16.msra.mxu0 0
        %1340 = vmatprep.subr.bf16.mxu0 0
        %1341 = vmatpush1.bf16.msra.mxu0 0
        %1342 = vmatprep.subr.bf16.mxu0 0
        %1343 = vmatpush1.bf16.msra.mxu0 0
        %1344 = vmatprep.subr.bf16.mxu0 0
        %1345 = vmatpush1.bf16.msra.mxu0 0
        %1346 = vmatprep.subr.bf16.mxu0 0
        %1347 = vmatpush1.bf16.msra.mxu0 0
        %1348 = vmatprep.subr.bf16.mxu0 0
        %1349 = vmatpush1.bf16.msra.mxu0 0
        %1350 = vmatprep.subr.bf16.mxu0 0
        %1351 = vmatpush1.bf16.msra.mxu0 0
        %1352 = vmatprep.subr.bf16.mxu0 0
        %1353 = vmatpush1.bf16.msra.mxu0 0
        %1354 = vmatprep.subr.bf16.mxu0 0
        %1355 = vmatpush1.bf16.msra.mxu0 0
        %1356 = vmatprep.subr.bf16.mxu0 0
        %1357 = vmatpush1.bf16.msra.mxu0 0
        %1358 = vmatprep.subr.bf16.mxu0 0
        %1359 = vmatpush1.bf16.msra.mxu0 0
        %1360 = vmatprep.subr.bf16.mxu0 0
        %1361 = vmatpush1.bf16.msra.mxu0 0
        %1362 = vmatprep.subr.bf16.mxu0 0
        %1363 = vmatpush1.bf16.msra.mxu0 0
        %1364 = vmatprep.subr.bf16.mxu0 0
        %1365 = vmatpush1.bf16.msra.mxu0 0
        %1366 = vmatprep.mubr.bf16.mxu0 0
        %1367 = vmatmul.mubr.bf16.gmra.mrb[0].mxu0 %v1332
        %v1368 = vpop.f32.mrb[0].mxu0
        %v1369 = vadd.f32 %v1317, %v1368
        %v1370 = vpop.f32.mrb[0].mxu0
        %v1371 = vpop.f32.mrb[0].mxu0
        %v1372 = vadd.f32 %v1317, %v1371
        %v1373 = vpop.f32.mrb[0].mxu0
        %1374 = vdwg.mxu0
        %1375 = vst [vmem:[%s380] sm:$0xff] %v1369
        %1376 = vst [vmem:[%s380 + $0x8] sm:$0xff] %v1372
        %s1377 = sand.u32 %s269, 1
        %s1378 = scalar_lea.sflag [#allocation8], %s1377
        %s1379 = sand.u32 %s269, 1
        %s1380 = smul.addr %s1379, 16
        %s1381 = scalar_lea.vmem [#allocation7], %s1380
        // Predicated region
        $region69: #{tpu_custom_call.1} parent=63 // pred_check
          %p1382 = pneg %p279
        $region70: #{tpu_custom_call.1} parent=63 // pred_check_branch
          %1384 = sbr.rel (%p1382) target = $region72
        $region71: #{tpu_custom_call.1} parent=63 // pred_region
          %s1385 = smul.u32 2, %s25
          %s1387 = ssub.s32 256, 256
          %1388 = vsyncadd %s1378, %s1387
          %s1389 = smul.addr %s1385, 128
          %s1390 = scalar_lea.hbm %s11, %s1389
          %s1391 = sshll.u32 %s1381, 4
          %s1392 = int_to_ptr.vmem [resolvable:$true] %s1391
          %1397 = dma.vmem_to_hbm [thread:$0]  %s1392, 256, %s1390, %s1378, 128, 128, 8
        $region72: #{tpu_custom_call.1} parent=63 // pred_fallthru
          _
      $region64: #{tpu_custom_call.1} parent=5 // pred_fallthru
        _
      %p1398 = scmp.le.s32.totalorder 2, %s20
      // Predicated region
      $region73: #{tpu_custom_call.1} parent=5 // pred_check
        %p1399 = pneg %p1398
      $region74: #{tpu_custom_call.1} parent=5 // pred_check_branch
        %1401 = sbr.rel (%p1399) target = $region76
      $region75: #{tpu_custom_call.1} parent=5 // pred_region
        %s1402 = ssub.s32 %s20, 2
        // Predicated region
        $region77: #{tpu_custom_call.1} parent=75 // pred_check
          %p1403 = pneg %p285
        $region78: #{tpu_custom_call.1} parent=75 // pred_check_branch
          %1405 = sbr.rel (%p1403) target = $region80
        $region79: #{tpu_custom_call.1} parent=75 // pred_region
          %s1406 = sand.u32 %s270, 1
          %s1407 = scalar_lea.sflag [#allocation8], %s1406
          %s1408 = sand.u32 %s270, 1
          %s1409 = smul.addr %s1408, 16
          %s1410 = scalar_lea.vmem [#allocation7], %s1409
          %1411 = dma.done %s1407, 256
        $region80: #{tpu_custom_call.1} parent=75 // pred_fallthru
          _
      $region76: #{tpu_custom_call.1} parent=5 // pred_fallthru
        _
    $region6: #{tpu_custom_call.1} parent=1 // loop_footer
      %s24 = sadd.s32 1, %s20
    $region7: #{tpu_custom_call.1} parent=1 // loop_footer_branch
      %19 = sbr.rel target = $region3
    $region8: #{tpu_custom_call.1} parent=1 // loop_exit
      _
    %1412 = vsyncpa [#allocation8], 1
    %s1413 = scalar_lea.sflag [#allocation8], 1
    %1414 = vsyncpa %s1413, 1

</llo_original>
